<compile_context>
chip_gen: v5e
topology: v5e:2x2
jax: 0.10.0
libtpu: 0.0.40
codegen_flags: <defaults>
</compile_context>

<pallas_src>
import functools
import math

import jax
import jax.numpy as jnp
import numpy as np
from jax.experimental import pallas as pl
from jax.experimental.pallas import tpu as pltpu


# ----------------------------- kernels --------------------------------------

def pythia_layer_kernel(h_ref, ln1_w_ref, ln1_b_ref,
                        wqkv_ref, bqkv_ref, wo_ref, bo_ref,
                        ln2_w_ref, ln2_b_ref,
                        w1_ref, b1_ref, w2_ref, b2_ref,
                        cos_ref, sa_ref, sb_ref,
                        out_ref, y_ref,
                        *, num_heads, head_dim, rot_half):
    """One GPT-NeoX (Pythia) layer. grid = (batch, D4_tiles)."""
    k_idx = pl.program_id(1)

    # ------------- k == 0: shared LN stats, attention branch, init output ----
    @pl.when(k_idx == 0)
    def _attention_and_init():
        h = h_ref[0]                                     # (S, D) f32
        S, D = h.shape
        H, hd = num_heads, head_dim

        # Shared LayerNorm statistics for LN1 / LN2 (parallel residual =>
        # identical input, so one mean/var pass feeds both).
        mu = jnp.mean(h, axis=-1, keepdims=True)
        var = jnp.mean(jnp.square(h - mu), axis=-1, keepdims=True)
        hn = (h - mu) * jax.lax.rsqrt(var + 1e-5)
        x = hn * ln1_w_ref[...] + ln1_b_ref[...]         # attention input
        # MLP input, stashed (bf16) for all D4 reduction steps of this batch b.
        y_ref[...] = (hn * ln2_w_ref[...] + ln2_b_ref[...]).astype(jnp.bfloat16)

        # Fused QKV projection: one MXU launch with N = 3D, one bias add.
        qkv = jnp.dot(x.astype(jnp.bfloat16), wqkv_ref[...],
                      preferred_element_type=jnp.float32) + bqkv_ref[...]
        q = qkv[:, :D] * (1.0 / math.sqrt(hd))           # fold 1/sqrt(hd) into q
        k = qkv[:, D:2 * D]
        v = qkv[:, 2 * D:]

        # Rotary embedding on the packed (S, D) layout.  rotate_half is two
        # XLU lane rotations times precomputed (+/-)sin tables; cos is 1 and
        # sa/sb are 0 outside each head's rotary sub-dims, so the rolls never
        # leak across head boundaries where it matters.
        cos = cos_ref[...]
        sa = sa_ref[...]
        sb = sb_ref[...]

        def rope(t):
            return (t * cos
                    + pltpu.roll(t, D - rot_half, 1) * sa    # picks t[j + half]
                    + pltpu.roll(t, rot_half, 1) * sb)       # picks t[j - half]

        q = rope(q)
        k = rope(k)

        # Head-batched attention: (H, S, hd) einsums, lane-dense context.
        def heads(t):
            return jnp.transpose(t.reshape(S, H, hd), (1, 0, 2)).astype(jnp.bfloat16)

        q3, k3, v3 = heads(q), heads(k), heads(v)
        scores = jnp.einsum('hqd,hkd->hqk', q3, k3,
                            preferred_element_type=jnp.float32)          # (H,S,S)
        row = jax.lax.broadcasted_iota(jnp.int32, (S, S), 0)
        col = jax.lax.broadcasted_iota(jnp.int32, (S, S), 1)
        scores = scores + jnp.where(row >= col, 0.0, -1e30)[None]
        # TODO(synk): external padding attention_mask not supported; causal-only.
        m = jnp.max(scores, axis=-1, keepdims=True)
        e = jnp.exp(scores - m)
        probs = e * pl.reciprocal(jnp.sum(e, axis=-1, keepdims=True), approx=True)
        ctx = jnp.einsum('hqk,hkd->hqd', probs.astype(jnp.bfloat16), v3,
                         preferred_element_type=jnp.float32)              # (H,S,hd)
        ctx = jnp.transpose(ctx, (1, 0, 2)).reshape(S, D).astype(jnp.bfloat16)

        # Single fused output projection, contraction K = D.
        attn = jnp.dot(ctx, wo_ref[...],
                       preferred_element_type=jnp.float32) + bo_ref[...]
        # use_parallel_residual = True (Pythia): out = h + attn + mlp.  b2 is
        # grid-invariant -> folded here instead of a predicated finalize step.
        out_ref[0] = h + attn + b2_ref[...]

    # ------------- every k: MLP partial for this D4 tile ---------------------
    mid = jnp.dot(y_ref[...], w1_ref[...],
                  preferred_element_type=jnp.float32) + b1_ref[...]
    # TODO(synk): HF Pythia uses erf-exact gelu; tanh approximation used (EUP).
    mid = jax.nn.gelu(mid, approximate=True)
    out_ref[0] = out_ref[0] + jnp.dot(mid.astype(jnp.bfloat16), w2_ref[...],
                                      preferred_element_type=jnp.float32)


def final_ln_kernel(h_ref, w_ref, b_ref, out_ref):
    h = h_ref[0]
    mu = jnp.mean(h, axis=-1, keepdims=True)
    var = jnp.mean(jnp.square(h - mu), axis=-1, keepdims=True)
    out_ref[0] = (h - mu) * jax.lax.rsqrt(var + 1e-5) * w_ref[...] + b_ref[...]


# ----------------------------- wrappers --------------------------------------

def _bcast(shape):
    """Block covering the whole (grid-invariant) array."""
    return pl.BlockSpec(shape, lambda *_, n=len(shape): (0,) * n)


def make_layer_call(B, S, D, H, hd, rot_half, D4, d4_tile):
    assert D4 % d4_tile == 0
    nk4 = D4 // d4_tile

    in_specs = [
        pl.BlockSpec((1, S, D), lambda b, k: (b, 0, 0)),      # hidden states
        _bcast((1, D)), _bcast((1, D)),                       # ln1 w, b
        _bcast((D, 3 * D)), _bcast((1, 3 * D)),               # fused QKV^T (bf16), bqkv
        _bcast((D, D)), _bcast((1, D)),                       # Wo^T (bf16), bo
        _bcast((1, D)), _bcast((1, D)),                       # ln2 w, b
        pl.BlockSpec((D, d4_tile), lambda b, k: (0, k)),      # W_h_to_4h^T tile
        pl.BlockSpec((1, d4_tile), lambda b, k: (0, k)),      # b_h_to_4h tile
        pl.BlockSpec((d4_tile, D), lambda b, k: (k, 0)),      # W_4h_to_h^T tile
        _bcast((1, D)),                                       # b_4h_to_h
        _bcast((S, D)), _bcast((S, D)), _bcast((S, D)),       # rotary cos / sa / sb
    ]
    out_spec = pl.BlockSpec((1, S, D), lambda b, k: (b, 0, 0))
    scratch = [pltpu.VMEM((S, D), jnp.bfloat16)]   # LN2(h), reused across D4 tiles

    # Rough resident-VMEM budget: double-buffered blocks + scratch + headroom,
    # clamped to the actual per-core VMEM capacity (v7x: 64 MiB).
    f32, bf16 = 4, 2
    block_bytes = (
        2 * S * D * f32                          # hidden in + out blocks
        + (10 * D + 3 * D + d4_tile) * f32       # ln weights / bias vectors
        + 3 * D * D * bf16                       # fused QKV weight (bf16)
        + D * D * bf16                           # Wo (bf16)
        + 2 * D * d4_tile * bf16                 # W1, W2 tiles (bf16)
        + 3 * S * D * f32                        # rotary tables
    )
    scratch_bytes = S * D * bf16
    vmem_limit = 2 * block_bytes + scratch_bytes + (16 << 20)
    vmem_cap = 64 << 20
    try:
        vmem_cap = int(pltpu.get_tpu_info().vmem_capacity_bytes)
    except Exception:
        pass
    vmem_limit = max(32 << 20, vmem_limit)
    vmem_limit = int(min(vmem_limit, vmem_cap - (4 << 20)))

    kernel = functools.partial(pythia_layer_kernel,
                               num_heads=H, head_dim=hd, rot_half=rot_half)
    return pl.pallas_call(
        kernel,
        out_shape=jax.ShapeDtypeStruct((B, S, D), jnp.float32),
        grid_spec=pltpu.PrefetchScalarGridSpec(
            num_scalar_prefetch=0, grid=(B, nk4),
            in_specs=in_specs, out_specs=out_spec,
            scratch_shapes=scratch),
        compiler_params=pltpu.CompilerParams(
            dimension_semantics=("parallel", "arbitrary"),
            vmem_limit_bytes=vmem_limit),
    )


def make_final_ln_call(B, S, D):
    return pl.pallas_call(
        final_ln_kernel,
        out_shape=jax.ShapeDtypeStruct((B, S, D), jnp.float32),
        grid_spec=pltpu.PrefetchScalarGridSpec(
            num_scalar_prefetch=0, grid=(B,),
            in_specs=[pl.BlockSpec((1, S, D), lambda b: (b, 0, 0)),
                      _bcast((1, D)), _bcast((1, D))],
            out_specs=pl.BlockSpec((1, S, D), lambda b: (b, 0, 0))),
        compiler_params=pltpu.CompilerParams(
            dimension_semantics=("parallel",)),
    )


def rotary_tables_packed(S, H, hd, rotary_pct=0.25, base=10000.0):
    """Packed (S, H*hd) rotary tables.

    cos: cos(emb) over each head's rotary dims, 1 elsewhere.
    sa : multiplies roll(x, D-half) (== x[j+half]): -sin(emb) on dims [0, half), 0 elsewhere.
    sb : multiplies roll(x, half)   (== x[j-half]): +sin(emb) on dims [half, r), 0 elsewhere.
    Together:  x*cos + roll(x, D-half)*sa + roll(x, half)*sb == GPT-NeoX rotary.
    """
    r = int(hd * rotary_pct)
    r = max(2, (r // 2) * 2)
    half = r // 2
    pos = np.arange(S, dtype=np.float32)
    inv_freq = 1.0 / (base ** (np.arange(0, r, 2, dtype=np.float32) / r))
    freqs = pos[:, None] * inv_freq[None, :]                     # (S, half)
    emb = np.concatenate([freqs, freqs], axis=-1)                # (S, r)
    cos_h = np.concatenate([np.cos(emb), np.ones((S, hd - r), np.float32)], -1)
    sin_e = np.sin(emb)
    sa_h = np.concatenate([-sin_e[:, :half], np.zeros((S, hd - half), np.float32)], -1)
    sb_h = np.concatenate([np.zeros((S, half), np.float32), sin_e[:, half:],
                           np.zeros((S, hd - r), np.float32)], -1)
    tile = lambda t: jnp.asarray(np.tile(t, (1, H)))             # (S, D)
    return tile(cos_h), tile(sa_h), tile(sb_h), half


def init_params(key, n_layers, D, D4):
    def nrm(k, shape):
        return jax.random.normal(k, shape, jnp.float32) * 0.02

    layers = []
    for _ in range(n_layers):
        key, *ks = jax.random.split(key, 7)
        layers.append(dict(
            ln1_w=jnp.ones((1, D), jnp.float32), ln1_b=jnp.zeros((1, D), jnp.float32),
            wq=nrm(ks[0], (D, D)), bq=jnp.zeros((1, D), jnp.float32),
            wk=nrm(ks[1], (D, D)), bk=jnp.zeros((1, D), jnp.float32),
            wv=nrm(ks[2], (D, D)), bv=jnp.zeros((1, D), jnp.float32),
            wo=nrm(ks[3], (D, D)), bo=jnp.zeros((1, D), jnp.float32),
            ln2_w=jnp.ones((1, D), jnp.float32), ln2_b=jnp.zeros((1, D), jnp.float32),
            w1=nrm(ks[4], (D4, D)), b1=jnp.zeros((1, D4), jnp.float32),
            w2=nrm(ks[5], (D, D4)), b2=jnp.zeros((1, D), jnp.float32),
        ))
    final = dict(w=jnp.ones((1, D), jnp.float32), b=jnp.zeros((1, D), jnp.float32))
    return layers, final


def preprocess_params(layer_params):
    """One-time weight prep (hoisted out of the forward loop): transpose
    nn.Linear W[out,in] -> [in,out], fuse Wq/Wk/Wv, cast matmul weights to bf16."""
    bf16 = jnp.bfloat16
    prepped = []
    for p in layer_params:
        prepped.append(dict(
            ln1_w=p["ln1_w"], ln1_b=p["ln1_b"],
            wqkv=jnp.concatenate([p["wq"].T, p["wk"].T, p["wv"].T], axis=1).astype(bf16),
            bqkv=jnp.concatenate([p["bq"], p["bk"], p["bv"]], axis=1),
            wo=p["wo"].T.astype(bf16), bo=p["bo"],
            ln2_w=p["ln2_w"], ln2_b=p["ln2_b"],
            w1=p["w1"].T.astype(bf16), b1=p["b1"],
            w2=p["w2"].T.astype(bf16), b2=p["b2"],
        ))
    return prepped


def custom_pythia_forward(inputs_embeds, prep_layers, final_ln, rope_tables,
                          H, hd, rot_half, d4_tile=512):
    """Mirrors CustomPythiaModel.forward: returns the all_hidden_states tuple."""
    B, S, D = inputs_embeds.shape
    D4 = prep_layers[0]["w1"].shape[1]
    d4_tile = min(d4_tile, D4)
    cos, sa, sb = rope_tables
    layer_call = make_layer_call(B, S, D, H, hd, rot_half, D4, d4_tile)
    ln_call = make_final_ln_call(B, S, D)

    all_hidden_states = []
    h = inputs_embeds
    for p in prep_layers:
        all_hidden_states.append(h)                 # pre-layer hidden state
        h = layer_call(h, p["ln1_w"], p["ln1_b"],
                       p["wqkv"], p["bqkv"], p["wo"], p["bo"],
                       p["ln2_w"], p["ln2_b"],
                       p["w1"], p["b1"], p["w2"], p["b2"],
                       cos, sa, sb)
    h = ln_call(h, final_ln["w"], final_ln["b"])    # final_layer_norm
    all_hidden_states.append(h)
    return tuple(all_hidden_states)


# ------------------------------- main ----------------------------------------

if __name__ == "__main__":
    B, S, D, H, L = 2, 8, 64, 4, 2            # batch, seq, hidden, heads, layers
    hd = D // H                               # 16
    D4 = 4 * D                                # 256
    d4_tile = 128                             # exercises the 2-step D4 reduction

    key = jax.random.PRNGKey(0)
    key, k_emb = jax.random.split(key)
    inputs_embeds = jax.random.normal(k_emb, (B, S, D), jnp.float32)

    layer_params, final_ln = init_params(key, L, D, D4)
    prep_layers = preprocess_params(layer_params)            # hoisted weight prep
    cos, sa, sb, rot_half = rotary_tables_packed(S, H, hd, rotary_pct=0.25)

    outs = custom_pythia_forward(inputs_embeds, prep_layers, final_ln,
                                 (cos, sa, sb), H, hd, rot_half, d4_tile=d4_tile)
    jax.block_until_ready(outs)
    assert len(outs) == L + 1 and all(o.shape == (B, S, D) for o in outs)
    assert all(bool(jnp.all(jnp.isfinite(o))) for o in outs)
    print("KERNEL_OK")
</pallas_src>

<mosaic_0001>
module attributes {stable_mosaic.version = 11 : i64} {
  func.func @pythia_layer_kernel(%arg0: i32, %arg1: i32, %arg2: memref<1x8x64xf32, #tpu.memory_space<vmem>>, %arg3: memref<1x64xf32, #tpu.memory_space<vmem>>, %arg4: memref<1x64xf32, #tpu.memory_space<vmem>>, %arg5: memref<64x192xbf16, #tpu.memory_space<vmem>>, %arg6: memref<1x192xf32, #tpu.memory_space<vmem>>, %arg7: memref<64x64xbf16, #tpu.memory_space<vmem>>, %arg8: memref<1x64xf32, #tpu.memory_space<vmem>>, %arg9: memref<1x64xf32, #tpu.memory_space<vmem>>, %arg10: memref<1x64xf32, #tpu.memory_space<vmem>>, %arg11: memref<64x128xbf16, #tpu.memory_space<vmem>>, %arg12: memref<1x128xf32, #tpu.memory_space<vmem>>, %arg13: memref<128x64xbf16, #tpu.memory_space<vmem>>, %arg14: memref<1x64xf32, #tpu.memory_space<vmem>>, %arg15: memref<8x64xf32, #tpu.memory_space<vmem>>, %arg16: memref<8x64xf32, #tpu.memory_space<vmem>>, %arg17: memref<8x64xf32, #tpu.memory_space<vmem>>, %arg18: memref<1x8x64xf32, #tpu.memory_space<vmem>>, %arg19: memref<8x64xbf16, #tpu.memory_space<vmem>>) attributes {dimension_semantics = [#tpu.dimension_semantics<parallel>, #tpu.dimension_semantics<arbitrary>], iteration_bounds = array<i64: 2, 2>, scalar_prefetch = 0 : i64, scratch_operands = 1 : i64, tpu.core_type = #tpu.core_type<tc>, window_params = [{transform_indices = @transform_0, window_bounds = array<i64: 1, 8, 64>}, {pipeline_mode = #tpu.pipeline_mode<synchronous>, transform_indices = @transform_1, window_bounds = array<i64: 1, 64>}, {pipeline_mode = #tpu.pipeline_mode<synchronous>, transform_indices = @transform_2, window_bounds = array<i64: 1, 64>}, {pipeline_mode = #tpu.pipeline_mode<synchronous>, transform_indices = @transform_3, window_bounds = array<i64: 64, 192>}, {pipeline_mode = #tpu.pipeline_mode<synchronous>, transform_indices = @transform_4, window_bounds = array<i64: 1, 192>}, {pipeline_mode = #tpu.pipeline_mode<synchronous>, transform_indices = @transform_5, window_bounds = array<i64: 64, 64>}, {pipeline_mode = #tpu.pipeline_mode<synchronous>, transform_indices = @transform_6, window_bounds = array<i64: 1, 64>}, {pipeline_mode = #tpu.pipeline_mode<synchronous>, transform_indices = @transform_7, window_bounds = array<i64: 1, 64>}, {pipeline_mode = #tpu.pipeline_mode<synchronous>, transform_indices = @transform_8, window_bounds = array<i64: 1, 64>}, {transform_indices = @transform_9, window_bounds = array<i64: 64, 128>}, {transform_indices = @transform_10, window_bounds = array<i64: 1, 128>}, {transform_indices = @transform_11, window_bounds = array<i64: 128, 64>}, {pipeline_mode = #tpu.pipeline_mode<synchronous>, transform_indices = @transform_12, window_bounds = array<i64: 1, 64>}, {pipeline_mode = #tpu.pipeline_mode<synchronous>, transform_indices = @transform_13, window_bounds = array<i64: 8, 64>}, {pipeline_mode = #tpu.pipeline_mode<synchronous>, transform_indices = @transform_14, window_bounds = array<i64: 8, 64>}, {pipeline_mode = #tpu.pipeline_mode<synchronous>, transform_indices = @transform_15, window_bounds = array<i64: 8, 64>}, {transform_indices = @transform_16, window_bounds = array<i64: 1, 8, 64>}]} {
    %c0_i32 = arith.constant 0 : i32
    %0 = arith.cmpi eq, %arg1, %c0_i32 : i32
    %1 = arith.extui %0 : i1 to i32
    %c0_i32_0 = arith.constant 0 : i32
    %2 = arith.cmpi ne, %1, %c0_i32_0 : i32
    scf.if %2 {
      %c0_19 = arith.constant 0 : index
      %c0_20 = arith.constant 0 : index
      %c0_21 = arith.constant 0 : index
      %31 = vector.load %arg2[%c0_19, %c0_20, %c0_21] : memref<1x8x64xf32, #tpu.memory_space<vmem>>, vector<1x8x64xf32>
      %32 = vector.shape_cast %31 : vector<1x8x64xf32> to vector<8x64xf32>
      %cst_22 = arith.constant dense<0.000000e+00> : vector<8xf32>
      %33 = vector.multi_reduction <add>, %32, %cst_22 [1] : vector<8x64xf32> to vector<8xf32>
      %34 = vector.shape_cast %33 : vector<8xf32> to vector<8x1xf32>
      %cst_23 = arith.constant 6.400000e+01 : f32
      %35 = vector.broadcast %cst_23 : f32 to vector<8x1xf32>
      %36 = arith.divf %34, %35 : vector<8x1xf32>
      %37 = vector.broadcast %36 : vector<8x1xf32> to vector<8x64xf32>
      %38 = arith.subf %32, %37 : vector<8x64xf32>
      %39 = arith.mulf %38, %38 : vector<8x64xf32>
      %cst_24 = arith.constant dense<0.000000e+00> : vector<8xf32>
      %40 = vector.multi_reduction <add>, %39, %cst_24 [1] : vector<8x64xf32> to vector<8xf32>
      %41 = vector.shape_cast %40 : vector<8xf32> to vector<8x1xf32>
      %cst_25 = arith.constant 6.400000e+01 : f32
      %42 = vector.broadcast %cst_25 : f32 to vector<8x1xf32>
      %43 = arith.divf %41, %42 : vector<8x1xf32>
      %44 = vector.broadcast %36 : vector<8x1xf32> to vector<8x64xf32>
      %45 = arith.subf %32, %44 : vector<8x64xf32>
      %cst_26 = arith.constant 9.99999974E-6 : f32
      %46 = vector.broadcast %cst_26 : f32 to vector<8x1xf32>
      %47 = arith.addf %43, %46 : vector<8x1xf32>
      %48 = math.rsqrt %47 : vector<8x1xf32>
      %49 = vector.broadcast %48 : vector<8x1xf32> to vector<8x64xf32>
      %50 = arith.mulf %45, %49 : vector<8x64xf32>
      %c0_27 = arith.constant 0 : index
      %c0_28 = arith.constant 0 : index
      %51 = vector.load %arg3[%c0_27, %c0_28] : memref<1x64xf32, #tpu.memory_space<vmem>>, vector<1x64xf32>
      %52 = vector.broadcast %51 : vector<1x64xf32> to vector<8x64xf32>
      %53 = arith.mulf %50, %52 : vector<8x64xf32>
      %c0_29 = arith.constant 0 : index
      %c0_30 = arith.constant 0 : index
      %54 = vector.load %arg4[%c0_29, %c0_30] : memref<1x64xf32, #tpu.memory_space<vmem>>, vector<1x64xf32>
      %55 = vector.broadcast %54 : vector<1x64xf32> to vector<8x64xf32>
      %56 = arith.addf %53, %55 : vector<8x64xf32>
      %c0_31 = arith.constant 0 : index
      %c0_32 = arith.constant 0 : index
      %57 = vector.load %arg9[%c0_31, %c0_32] : memref<1x64xf32, #tpu.memory_space<vmem>>, vector<1x64xf32>
      %58 = vector.broadcast %57 : vector<1x64xf32> to vector<8x64xf32>
      %59 = arith.mulf %50, %58 : vector<8x64xf32>
      %c0_33 = arith.constant 0 : index
      %c0_34 = arith.constant 0 : index
      %60 = vector.load %arg10[%c0_33, %c0_34] : memref<1x64xf32, #tpu.memory_space<vmem>>, vector<1x64xf32>
      %61 = vector.broadcast %60 : vector<1x64xf32> to vector<8x64xf32>
      %62 = arith.addf %59, %61 : vector<8x64xf32>
      %63 = arith.truncf %62 : vector<8x64xf32> to vector<8x64xbf16>
      %c0_35 = arith.constant 0 : index
      %c0_36 = arith.constant 0 : index
      %64 = vector.load %arg19[%c0_35, %c0_36] : memref<8x64xbf16, #tpu.memory_space<vmem>>, vector<8x64xbf16>
      tpu.vector_store %arg19[%c0_35, %c0_36], %63 {strides = array<i32>} : memref<8x64xbf16, #tpu.memory_space<vmem>>, vector<8x64xbf16>,
      %65 = arith.truncf %56 : vector<8x64xf32> to vector<8x64xbf16>
      %c0_37 = arith.constant 0 : index
      %c0_38 = arith.constant 0 : index
      %66 = vector.load %arg5[%c0_37, %c0_38] : memref<64x192xbf16, #tpu.memory_space<vmem>>, vector<64x192xbf16>
      %cst_39 = arith.constant dense<0.000000e+00> : vector<8x192xf32>
      %67 = tpu.matmul %65, %66, %cst_39 {dimension_numbers = #tpu.dot_dimension_numbers<[1], [0], [0], [1], [0, 0, 1, 1], [], []>} : vector<8x64xbf16>, vector<64x192xbf16>, vector<8x192xf32> -> vector<8x192xf32>
      %c0_40 = arith.constant 0 : index
      %c0_41 = arith.constant 0 : index
      %68 = vector.load %arg6[%c0_40, %c0_41] : memref<1x192xf32, #tpu.memory_space<vmem>>, vector<1x192xf32>
      %69 = vector.broadcast %68 : vector<1x192xf32> to vector<8x192xf32>
      %70 = arith.addf %67, %69 : vector<8x192xf32>
      %71 = vector.extract_strided_slice %70 {offsets = [0, 0], sizes = [8, 64], strides = [1, 1]} : vector<8x192xf32> to vector<8x64xf32>
      %cst_42 = arith.constant 2.500000e-01 : f32
      %72 = vector.broadcast %cst_42 : f32 to vector<8x64xf32>
      %73 = arith.mulf %71, %72 : vector<8x64xf32>
      %74 = vector.extract_strided_slice %70 {offsets = [0, 64], sizes = [8, 64], strides = [1, 1]} : vector<8x192xf32> to vector<8x64xf32>
      %75 = vector.extract_strided_slice %70 {offsets = [0, 128], sizes = [8, 64], strides = [1, 1]} : vector<8x192xf32> to vector<8x64xf32>
      %c0_43 = arith.constant 0 : index
      %c0_44 = arith.constant 0 : index
      %76 = vector.load %arg15[%c0_43, %c0_44] : memref<8x64xf32, #tpu.memory_space<vmem>>, vector<8x64xf32>
      %c0_45 = arith.constant 0 : index
      %c0_46 = arith.constant 0 : index
      %77 = vector.load %arg16[%c0_45, %c0_46] : memref<8x64xf32, #tpu.memory_space<vmem>>, vector<8x64xf32>
      %c0_47 = arith.constant 0 : index
      %c0_48 = arith.constant 0 : index
      %78 = vector.load %arg17[%c0_47, %c0_48] : memref<8x64xf32, #tpu.memory_space<vmem>>, vector<8x64xf32>
      %79 = arith.mulf %73, %76 : vector<8x64xf32>
      %c62_i32 = arith.constant 62 : i32
      %80 = tpu.dynamic_rotate %73 by %c62_i32 dim 1 : vector<8x64xf32>, i32 -> vector<8x64xf32>
      %81 = arith.mulf %80, %77 : vector<8x64xf32>
      %82 = arith.addf %79, %81 : vector<8x64xf32>
      %c2_i32 = arith.constant 2 : i32
      %83 = tpu.dynamic_rotate %73 by %c2_i32 dim 1 : vector<8x64xf32>, i32 -> vector<8x64xf32>
      %84 = arith.mulf %83, %78 : vector<8x64xf32>
      %85 = arith.addf %82, %84 : vector<8x64xf32>
      %86 = arith.mulf %74, %76 : vector<8x64xf32>
      %c62_i32_49 = arith.constant 62 : i32
      %87 = tpu.dynamic_rotate %74 by %c62_i32_49 dim 1 : vector<8x64xf32>, i32 -> vector<8x64xf32>
      %88 = arith.mulf %87, %77 : vector<8x64xf32>
      %89 = arith.addf %86, %88 : vector<8x64xf32>
      %c2_i32_50 = arith.constant 2 : i32
      %90 = tpu.dynamic_rotate %74 by %c2_i32_50 dim 1 : vector<8x64xf32>, i32 -> vector<8x64xf32>
      %91 = arith.mulf %90, %78 : vector<8x64xf32>
      %92 = arith.addf %89, %91 : vector<8x64xf32>
      %93 = vector.shape_cast %85 : vector<8x64xf32> to vector<8x4x16xf32>
      %94 = tpu.transpose %93, [1, 0, 2] : vector<8x4x16xf32> -> vector<4x8x16xf32>
      %95 = arith.truncf %94 : vector<4x8x16xf32> to vector<4x8x16xbf16>
      %96 = vector.shape_cast %92 : vector<8x64xf32> to vector<8x4x16xf32>
      %97 = tpu.transpose %96, [1, 0, 2] : vector<8x4x16xf32> -> vector<4x8x16xf32>
      %98 = arith.truncf %97 : vector<4x8x16xf32> to vector<4x8x16xbf16>
      %99 = vector.shape_cast %75 : vector<8x64xf32> to vector<8x4x16xf32>
      %100 = tpu.transpose %99, [1, 0, 2] : vector<8x4x16xf32> -> vector<4x8x16xf32>
      %101 = arith.truncf %100 : vector<4x8x16xf32> to vector<4x8x16xbf16>
      "tpu.trace_start"() <{level = 10 : i32, message = "hqd,hkd->hqk"}> : () -> ()
      %cst_51 = arith.constant dense<0.000000e+00> : vector<4x8x8xf32>
      %102 = tpu.matmul %95, %98, %cst_51 {dimension_numbers = #tpu.dot_dimension_numbers<[2], [2], [1], [1], [0, 0, 0, 1, 1, 1], [0], [0]>} : vector<4x8x16xbf16>, vector<4x8x16xbf16>, vector<4x8x8xf32> -> vector<4x8x8xf32>
      "tpu.trace_stop"() : () -> ()
      %103 = tpu.iota {dimensions = array<i32: 0>} : vector<8x8xi32>
      %104 = tpu.iota {dimensions = array<i32: 1>} : vector<8x8xi32>
      %105 = arith.cmpi sge, %103, %104 : vector<8x8xi32>
      %cst_52 = arith.constant 0.000000e+00 : f32
      %cst_53 = arith.constant -1.000000e+30 : f32
      %106 = vector.broadcast %cst_52 : f32 to vector<8x8xf32>
      %107 = vector.broadcast %cst_53 : f32 to vector<8x8xf32>
      %108 = arith.select %105, %106, %107 : vector<8x8xi1>, vector<8x8xf32>
      %109 = vector.shape_cast %108 : vector<8x8xf32> to vector<1x8x8xf32>
      %110 = vector.broadcast %109 : vector<1x8x8xf32> to vector<4x8x8xf32>
      %111 = arith.addf %102, %110 : vector<4x8x8xf32>
      %cst_54 = arith.constant dense<0xFF800000> : vector<4x8xf32>
      %112 = vector.multi_reduction <maximumf>, %111, %cst_54 [2] : vector<4x8x8xf32> to vector<4x8xf32>
      %113 = vector.shape_cast %112 : vector<4x8xf32> to vector<4x8x1xf32>
      %114 = vector.broadcast %113 : vector<4x8x1xf32> to vector<4x8x8xf32>
      %115 = arith.subf %111, %114 : vector<4x8x8xf32>
      %116 = math.exp %115 : vector<4x8x8xf32>
      %cst_55 = arith.constant dense<0.000000e+00> : vector<4x8xf32>
      %117 = vector.multi_reduction <add>, %116, %cst_55 [2] : vector<4x8x8xf32> to vector<4x8xf32>
      %118 = vector.shape_cast %117 : vector<4x8xf32> to vector<4x8x1xf32>
      %119 = tpu.reciprocal %118 {approx = true} : vector<4x8x1xf32> -> vector<4x8x1xf32>
      %120 = vector.broadcast %119 : vector<4x8x1xf32> to vector<4x8x8xf32>
      %121 = arith.mulf %116, %120 : vector<4x8x8xf32>
      %122 = arith.truncf %121 : vector<4x8x8xf32> to vector<4x8x8xbf16>
      "tpu.trace_start"() <{level = 10 : i32, message = "hqk,hkd->hqd"}> : () -> ()
      %cst_56 = arith.constant dense<0.000000e+00> : vector<4x8x16xf32>
      %123 = tpu.matmul %122, %101, %cst_56 {dimension_numbers = #tpu.dot_dimension_numbers<[2], [1], [1], [2], [0, 0, 0, 1, 1, 2], [0], [0]>} : vector<4x8x8xbf16>, vector<4x8x16xbf16>, vector<4x8x16xf32> -> vector<4x8x16xf32>
      "tpu.trace_stop"() : () -> ()
      %124 = tpu.transpose %123, [1, 0, 2] : vector<4x8x16xf32> -> vector<8x4x16xf32>
      %125 = vector.shape_cast %124 : vector<8x4x16xf32> to vector<8x64xf32>
      %126 = arith.truncf %125 : vector<8x64xf32> to vector<8x64xbf16>
      %c0_57 = arith.constant 0 : index
      %c0_58 = arith.constant 0 : index
      %127 = vector.load %arg7[%c0_57, %c0_58] : memref<64x64xbf16, #tpu.memory_space<vmem>>, vector<64x64xbf16>
      %cst_59 = arith.constant dense<0.000000e+00> : vector<8x64xf32>
      %128 = tpu.matmul %126, %127, %cst_59 {dimension_numbers = #tpu.dot_dimension_numbers<[1], [0], [0], [1], [0, 0, 1, 1], [], []>} : vector<8x64xbf16>, vector<64x64xbf16>, vector<8x64xf32> -> vector<8x64xf32>
      %c0_60 = arith.constant 0 : index
      %c0_61 = arith.constant 0 : index
      %129 = vector.load %arg8[%c0_60, %c0_61] : memref<1x64xf32, #tpu.memory_space<vmem>>, vector<1x64xf32>
      %130 = vector.broadcast %129 : vector<1x64xf32> to vector<8x64xf32>
      %131 = arith.addf %128, %130 : vector<8x64xf32>
      %132 = arith.addf %32, %131 : vector<8x64xf32>
      %c0_62 = arith.constant 0 : index
      %c0_63 = arith.constant 0 : index
      %133 = vector.load %arg14[%c0_62, %c0_63] : memref<1x64xf32, #tpu.memory_space<vmem>>, vector<1x64xf32>
      %134 = vector.broadcast %133 : vector<1x64xf32> to vector<8x64xf32>
      %135 = arith.addf %132, %134 : vector<8x64xf32>
      %c0_64 = arith.constant 0 : index
      %c0_65 = arith.constant 0 : index
      %c0_66 = arith.constant 0 : index
      %136 = vector.load %arg18[%c0_64, %c0_65, %c0_66] : memref<1x8x64xf32, #tpu.memory_space<vmem>>, vector<1x8x64xf32>
      %137 = vector.shape_cast %136 : vector<1x8x64xf32> to vector<8x64xf32>
      %138 = vector.shape_cast %135 : vector<8x64xf32> to vector<1x8x64xf32>
      tpu.vector_store %arg18[%c0_64, %c0_65, %c0_66], %138 {strides = array<i32>} : memref<1x8x64xf32, #tpu.memory_space<vmem>>, vector<1x8x64xf32>,
    } else {
    }
    %c0 = arith.constant 0 : index
    %c0_1 = arith.constant 0 : index
    %3 = vector.load %arg19[%c0, %c0_1] : memref<8x64xbf16, #tpu.memory_space<vmem>>, vector<8x64xbf16>
    %c0_2 = arith.constant 0 : index
    %c0_3 = arith.constant 0 : index
    %4 = vector.load %arg11[%c0_2, %c0_3] : memref<64x128xbf16, #tpu.memory_space<vmem>>, vector<64x128xbf16>
    %cst = arith.constant dense<0.000000e+00> : vector<8x128xf32>
    %5 = tpu.matmul %3, %4, %cst {dimension_numbers = #tpu.dot_dimension_numbers<[1], [0], [0], [1], [0, 0, 1, 1], [], []>} : vector<8x64xbf16>, vector<64x128xbf16>, vector<8x128xf32> -> vector<8x128xf32>
    %c0_4 = arith.constant 0 : index
    %c0_5 = arith.constant 0 : index
    %6 = vector.load %arg12[%c0_4, %c0_5] : memref<1x128xf32, #tpu.memory_space<vmem>>, vector<1x128xf32>
    %7 = vector.broadcast %6 : vector<1x128xf32> to vector<8x128xf32>
    %8 = arith.addf %5, %7 : vector<8x128xf32>
    %9 = arith.mulf %8, %8 : vector<8x128xf32>
    %10 = arith.mulf %8, %9 : vector<8x128xf32>
    %cst_6 = arith.constant 4.471500e-02 : f32
    %11 = vector.broadcast %cst_6 : f32 to vector<8x128xf32>
    %12 = arith.mulf %11, %10 : vector<8x128xf32>
    %13 = arith.addf %8, %12 : vector<8x128xf32>
    %cst_7 = arith.constant 0.797884583 : f32
    %14 = vector.broadcast %cst_7 : f32 to vector<8x128xf32>
    %15 = arith.mulf %14, %13 : vector<8x128xf32>
    %16 = math.tanh %15 : vector<8x128xf32>
    %cst_8 = arith.constant 1.000000e+00 : f32
    %17 = vector.broadcast %cst_8 : f32 to vector<8x128xf32>
    %18 = arith.addf %17, %16 : vector<8x128xf32>
    %cst_9 = arith.constant 5.000000e-01 : f32
    %19 = vector.broadcast %cst_9 : f32 to vector<8x128xf32>
    %20 = arith.mulf %19, %18 : vector<8x128xf32>
    %21 = arith.mulf %8, %20 : vector<8x128xf32>
    %c0_10 = arith.constant 0 : index
    %c0_11 = arith.constant 0 : index
    %c0_12 = arith.constant 0 : index
    %22 = vector.load %arg18[%c0_10, %c0_11, %c0_12] : memref<1x8x64xf32, #tpu.memory_space<vmem>>, vector<1x8x64xf32>
    %23 = vector.shape_cast %22 : vector<1x8x64xf32> to vector<8x64xf32>
    %24 = arith.truncf %21 : vector<8x128xf32> to vector<8x128xbf16>
    %c0_13 = arith.constant 0 : index
    %c0_14 = arith.constant 0 : index
    %25 = vector.load %arg13[%c0_13, %c0_14] : memref<128x64xbf16, #tpu.memory_space<vmem>>, vector<128x64xbf16>
    %cst_15 = arith.constant dense<0.000000e+00> : vector<8x64xf32>
    %26 = tpu.matmul %24, %25, %cst_15 {dimension_numbers = #tpu.dot_dimension_numbers<[1], [0], [0], [1], [0, 0, 1, 1], [], []>} : vector<8x128xbf16>, vector<128x64xbf16>, vector<8x64xf32> -> vector<8x64xf32>
    %27 = arith.addf %23, %26 : vector<8x64xf32>
    %c0_16 = arith.constant 0 : index
    %c0_17 = arith.constant 0 : index
    %c0_18 = arith.constant 0 : index
    %28 = vector.load %arg18[%c0_16, %c0_17, %c0_18] : memref<1x8x64xf32, #tpu.memory_space<vmem>>, vector<1x8x64xf32>
    %29 = vector.shape_cast %28 : vector<1x8x64xf32> to vector<8x64xf32>
    %30 = vector.shape_cast %27 : vector<8x64xf32> to vector<1x8x64xf32>
    tpu.vector_store %arg18[%c0_16, %c0_17, %c0_18], %30 {strides = array<i32>} : memref<1x8x64xf32, #tpu.memory_space<vmem>>, vector<1x8x64xf32>,
    return
  }
  func.func @transform_0(%arg0: i32, %arg1: i32) -> (i32, i32, i32) {
    %c0_i32 = arith.constant 0 : i32
    %c0_i32_0 = arith.constant 0 : i32
    %c0_i32_1 = arith.constant 0 : i32
    return %arg0, %c0_i32, %c0_i32_0 : i32, i32, i32
  }
  func.func @transform_1(%arg0: i32, %arg1: i32) -> (i32, i32) {
    %c0_i32 = arith.constant 0 : i32
    %c0_i32_0 = arith.constant 0 : i32
    %c0_i32_1 = arith.constant 0 : i32
    return %c0_i32, %c0_i32_0 : i32, i32
  }
  func.func @transform_2(%arg0: i32, %arg1: i32) -> (i32, i32) {
    %c0_i32 = arith.constant 0 : i32
    %c0_i32_0 = arith.constant 0 : i32
    %c0_i32_1 = arith.constant 0 : i32
    return %c0_i32, %c0_i32_0 : i32, i32
  }
  func.func @transform_3(%arg0: i32, %arg1: i32) -> (i32, i32) {
    %c0_i32 = arith.constant 0 : i32
    %c0_i32_0 = arith.constant 0 : i32
    %c0_i32_1 = arith.constant 0 : i32
    return %c0_i32, %c0_i32_0 : i32, i32
  }
  func.func @transform_4(%arg0: i32, %arg1: i32) -> (i32, i32) {
    %c0_i32 = arith.constant 0 : i32
    %c0_i32_0 = arith.constant 0 : i32
    %c0_i32_1 = arith.constant 0 : i32
    return %c0_i32, %c0_i32_0 : i32, i32
  }
  func.func @transform_5(%arg0: i32, %arg1: i32) -> (i32, i32) {
    %c0_i32 = arith.constant 0 : i32
    %c0_i32_0 = arith.constant 0 : i32
    %c0_i32_1 = arith.constant 0 : i32
    return %c0_i32, %c0_i32_0 : i32, i32
  }
  func.func @transform_6(%arg0: i32, %arg1: i32) -> (i32, i32) {
    %c0_i32 = arith.constant 0 : i32
    %c0_i32_0 = arith.constant 0 : i32
    %c0_i32_1 = arith.constant 0 : i32
    return %c0_i32, %c0_i32_0 : i32, i32
  }
  func.func @transform_7(%arg0: i32, %arg1: i32) -> (i32, i32) {
    %c0_i32 = arith.constant 0 : i32
    %c0_i32_0 = arith.constant 0 : i32
    %c0_i32_1 = arith.constant 0 : i32
    return %c0_i32, %c0_i32_0 : i32, i32
  }
  func.func @transform_8(%arg0: i32, %arg1: i32) -> (i32, i32) {
    %c0_i32 = arith.constant 0 : i32
    %c0_i32_0 = arith.constant 0 : i32
    %c0_i32_1 = arith.constant 0 : i32
    return %c0_i32, %c0_i32_0 : i32, i32
  }
  func.func @transform_9(%arg0: i32, %arg1: i32) -> (i32, i32) {
    %c0_i32 = arith.constant 0 : i32
    %c0_i32_0 = arith.constant 0 : i32
    return %c0_i32, %arg1 : i32, i32
  }
  func.func @transform_10(%arg0: i32, %arg1: i32) -> (i32, i32) {
    %c0_i32 = arith.constant 0 : i32
    %c0_i32_0 = arith.constant 0 : i32
    return %c0_i32, %arg1 : i32, i32
  }
  func.func @transform_11(%arg0: i32, %arg1: i32) -> (i32, i32) {
    %c0_i32 = arith.constant 0 : i32
    %c0_i32_0 = arith.constant 0 : i32
    return %arg1, %c0_i32 : i32, i32
  }
  func.func @transform_12(%arg0: i32, %arg1: i32) -> (i32, i32) {
    %c0_i32 = arith.constant 0 : i32
    %c0_i32_0 = arith.constant 0 : i32
    %c0_i32_1 = arith.constant 0 : i32
    return %c0_i32, %c0_i32_0 : i32, i32
  }
  func.func @transform_13(%arg0: i32, %arg1: i32) -> (i32, i32) {
    %c0_i32 = arith.constant 0 : i32
    %c0_i32_0 = arith.constant 0 : i32
    %c0_i32_1 = arith.constant 0 : i32
    return %c0_i32, %c0_i32_0 : i32, i32
  }
  func.func @transform_14(%arg0: i32, %arg1: i32) -> (i32, i32) {
    %c0_i32 = arith.constant 0 : i32
    %c0_i32_0 = arith.constant 0 : i32
    %c0_i32_1 = arith.constant 0 : i32
    return %c0_i32, %c0_i32_0 : i32, i32
  }
  func.func @transform_15(%arg0: i32, %arg1: i32) -> (i32, i32) {
    %c0_i32 = arith.constant 0 : i32
    %c0_i32_0 = arith.constant 0 : i32
    %c0_i32_1 = arith.constant 0 : i32
    return %c0_i32, %c0_i32_0 : i32, i32
  }
  func.func @transform_16(%arg0: i32, %arg1: i32) -> (i32, i32, i32) {
    %c0_i32 = arith.constant 0 : i32
    %c0_i32_0 = arith.constant 0 : i32
    %c0_i32_1 = arith.constant 0 : i32
    return %arg0, %c0_i32, %c0_i32_0 : i32, i32, i32
  }
}

</mosaic_0001>

<llo_original>
// kernel: tpu_custom_call.1
$region0: #{tpu_custom_call.1}
  #allocation0 [shape = 'u32[]', space=smem, size = 0x4, offset = 0x4, fixed_abs, tag = 'smem constant byte address 0x4 - core index']
  #allocation1 [shape = 'u32[72,128]{1,0:T(1,128)}', space=vmem, size = 0x9000, scoped, tag = 'internal scratch']
  #allocation2 [shape = 'bf16[8,64]{1,0:T(8,128)(2,1)}', space=vmem, size = 0x800, scoped, tag = 'scratch operand']
  %s0 = inlined_call_operand.vmem [shape: f32[2,8,64], index: 0, kind: input, shape index: {}]
  %s1 = inlined_call_operand.hbm [shape: f32[1,64], index: 1, kind: input, shape index: {}]
  %s2 = inlined_call_operand.hbm [shape: f32[1,64], index: 2, kind: input, shape index: {}]
  %s3 = inlined_call_operand.vmem [shape: bf16[64,192], index: 3, kind: input, shape index: {}]
  %s4 = inlined_call_operand.hbm [shape: f32[1,192], index: 4, kind: input, shape index: {}]
  %s5 = inlined_call_operand.vmem [shape: bf16[64,64], index: 5, kind: input, shape index: {}]
  %s6 = inlined_call_operand.hbm [shape: f32[1,64], index: 6, kind: input, shape index: {}]
  %s7 = inlined_call_operand.hbm [shape: f32[1,64], index: 7, kind: input, shape index: {}]
  %s8 = inlined_call_operand.hbm [shape: f32[1,64], index: 8, kind: input, shape index: {}]
  %s9 = inlined_call_operand.vmem [shape: bf16[64,256], index: 9, kind: input, shape index: {}]
  %s10 = inlined_call_operand.hbm [shape: f32[1,256], index: 10, kind: input, shape index: {}]
  %s11 = inlined_call_operand.vmem [shape: bf16[256,64], index: 11, kind: input, shape index: {}]
  %s12 = inlined_call_operand.vmem [shape: f32[1,64], index: 12, kind: input, shape index: {}]
  %s13 = inlined_call_operand.vmem [shape: f32[8,64], index: 13, kind: input, shape index: {}]
  %s14 = inlined_call_operand.vmem [shape: f32[8,64], index: 14, kind: input, shape index: {}]
  %s15 = inlined_call_operand.vmem [shape: f32[8,64], index: 15, kind: input, shape index: {}]
  %s16 = inlined_call_operand.hbm [shape: f32[2,8,64], index: 16, kind: output, shape index: {}]
  %s17 = sld [smem:[#allocation0]]
  $region170: #{tpu_custom_call.1} parent=0
    _
  %s19 = ssub.s32 1, %s17
  %s20 = scalar_select 0, %s19, %s17
  $region1: #{tpu_custom_call.1} parent=0
    #allocation3 [shape = 'u8[512]{0}', space=vmem, size = 0x400, scoped, tag = 'input window, operand 1, single buffered']
    #allocation4 [shape = 's32[2]{0}', space=sflag, size = 0x8, scoped, tag = 'scoped memory for tpu_custom_call.1']
    #allocation5 [shape = 's32[2]{0}', space=sflag, size = 0x8, scoped, tag = 'scoped memory for tpu_custom_call.1']
    #allocation6 [shape = 'u8[512]{0}', space=vmem, size = 0x400, scoped, tag = 'input window, operand 2, single buffered']
    #allocation7 [shape = 's32[1]{0}', space=sflag, size = 0x4, scoped, tag = 'scoped memory for tpu_custom_call.1']
    #allocation8 [shape = 'u8[1024]{0}', space=vmem, size = 0x400, scoped, tag = 'input window, operand 4, single buffered']
    #allocation9 [shape = 'u8[512]{0}', space=vmem, size = 0x400, scoped, tag = 'input window, operand 6, single buffered']
    #allocation10 [shape = 's32[1]{0}', space=sflag, size = 0x4, scoped, tag = 'scoped memory for tpu_custom_call.1']
    #allocation11 [shape = 'u8[512]{0}', space=vmem, size = 0x400, scoped, tag = 'input window, operand 7, single buffered']
    #allocation12 [shape = 'u8[512]{0}', space=vmem, size = 0x400, scoped, tag = 'input window, operand 8, single buffered']
    #allocation13 [shape = 's32[1]{0}', space=sflag, size = 0x4, scoped, tag = 'scoped memory for tpu_custom_call.1']
    #allocation14 [shape = 'u8[32768]{0}', space=vmem, size = 0x8000, scoped, tag = 'input window, operand 9']
    #allocation15 [shape = 'u8[1024]{0}', space=vmem, size = 0x400, scoped, tag = 'input window, operand 10']
    #allocation16 [shape = 'u8[8192]{0}', space=vmem, size = 0x2000, scoped, tag = 'output window, operand 0']
    %21 = vsyncpa [#allocation4], 0
    %22 = vsyncpa [#allocation7], 0
    %23 = vsyncpa [#allocation10], 0
    %24 = vsyncpa [#allocation13], 0
    %25 = vsyncpa [#allocation5], 0
    %s26 = scalar_lea.sflag [#allocation5], 1
    %27 = vsyncpa %s26, 0
    loop: start=0, step=1, limit=6
    $region2: #{tpu_custom_call.1} parent=1 // loop_pre_header
      _
    $region3: #{tpu_custom_call.1} parent=1 // loop_header
      %s29 = sphi 0, %s33
      %p30 = scmp.ge.s32.totalorder %s29, 6
      %s36 = sphi 0, %s48
      %s37 = sphi 0, %s44
      %s38 = sphi 0, %s36
      %s39 = sphi 0, %s37
      %s40 = sphi 0, %s38
      %s41 = sphi 0, %s39
      %s51 = sphi 0, %s53
      %s54 = sphi 0, %s51
      %s55 = sphi 0, %s54
      %s71 = sphi 0, %s55
      %s75 = sphi 0, %s75
      %s77 = sphi 0, %s75
      %s78 = sphi 0, %s77
      %s92 = sphi 0, %s78
      %s96 = sphi 0, %s96
      %s98 = sphi 0, %s96
      %s99 = sphi 0, %s98
      %s113 = sphi 0, %s99
      %s117 = sphi 0, %s117
      %s119 = sphi 0, %s117
      %s120 = sphi 0, %s119
      %s134 = sphi 0, %s120
      %s138 = sphi 0, %s138
      %s140 = sphi 0, %s138
      %s141 = sphi 0, %s140
      %s155 = sphi 0, %s141
      %s159 = sphi 0, %s159
      %s161 = sphi 0, %s159
      %s162 = sphi 0, %s161
      %s176 = sphi 0, %s162
      %s180 = sphi 0, %s180
      %s182 = sphi 0, %s180
      %s183 = sphi 0, %s182
      %s197 = sphi 0, %s183
      %s201 = sphi 0, %s201
      %s203 = sphi 0, %s201
      %s204 = sphi 0, %s203
      %s218 = sphi 0, %s204
      %s222 = sphi 0, %s222
      %s224 = sphi 0, %s222
      %s225 = sphi 0, %s224
      %s239 = sphi 0, %s225
      %s245 = sphi 0, %s247
      %s248 = sphi 0, %s245
      %s249 = sphi 0, %s248
      %s265 = sphi 0, %s249
      %s271 = sphi 0, %s273
      %s274 = sphi 0, %s271
      %s275 = sphi 0, %s274
      %s291 = sphi 0, %s275
      %s297 = sphi 0, %s299
      %s300 = sphi 0, %s297
      %s301 = sphi 0, %s300
      %s317 = sphi 0, %s301
      %s321 = sphi 0, %s321
      %s323 = sphi 0, %s321
      %s324 = sphi 0, %s323
      %s338 = sphi 0, %s324
      %s342 = sphi 0, %s342
      %s344 = sphi 0, %s342
      %s345 = sphi 0, %s344
      %s359 = sphi 0, %s345
      %s363 = sphi 0, %s363
      %s365 = sphi 0, %s363
      %s366 = sphi 0, %s365
      %s380 = sphi 0, %s366
      %s384 = sphi 0, %s384
      %s386 = sphi 0, %s384
      %s387 = sphi 0, %s386
      %s401 = sphi 0, %s387
      %s407 = sphi 0, %s409
      %s410 = sphi 0, %s407
      %s411 = sphi 0, %s410
      %s427 = sphi 0, %s411
    $region4: #{tpu_custom_call.1} parent=1 // loop_header_branch
      %32 = sbr.rel (%p30) target = $region8
    $region5: #{tpu_custom_call.1} parent=1 // loop_body
      %s34 = ssub.s32 %s29, 1
      %s35 = ssub.s32 %s29, 2
      %s42 = sadd.s32 1, %s37
      %p43 = scmp.ge.s32.totalorder %s42, 2
      %s44 = scalar_select %p43, 0, %s42
      %s45 = sadd.s32 1, %s36
      %s46 = scalar_select %p43, %s45, %s36
      %p47 = scmp.ge.s32.totalorder %s46, 2
      %s48 = scalar_select %p47, 0, %s46
      %s49 = ssub.s32 %s36, %s48
      %p50 = scmp.eq.s32.totalorder %s49, 0
      %s52 = sadd.s32 %s51, 1
      %s53 = scalar_select %p50, %s51, %s52
      %p56 = pneg %p50
      %p57 = scmp.eq.s32.totalorder %s29, 3
      %p58 = por %p56, %p57
      %p59 = scmp.ne.s32.totalorder %s51, %s54
      %p60 = scmp.eq.s32.totalorder %s29, 0
      %p61 = por %p59, %p60
      %p62 = scmp.ne.s32.totalorder %s51, %s54
      %p63 = scmp.eq.s32.totalorder %s34, 3
      %p64 = por %p62, %p63
      %p65 = scmp.ne.s32.totalorder %s54, %s55
      %p66 = scmp.eq.s32.totalorder %s34, 0
      %p67 = por %p65, %p66
      %p68 = scmp.ne.s32.totalorder %s54, %s55
      %p69 = scmp.eq.s32.totalorder %s35, 3
      %p70 = por %p68, %p69
      %p72 = scmp.ne.s32.totalorder %s55, %s71
      %p73 = scmp.eq.s32.totalorder %s35, 0
      %p74 = por %p72, %p73
      %s76 = sadd.s32 %s75, 1
      %p79 = scmp.eq.s32.totalorder %s29, 3
      %p80 = scmp.ne.s32.totalorder %s75, %s77
      %p81 = scmp.eq.s32.totalorder %s29, 0
      %p82 = por %p80, %p81
      %p83 = scmp.ne.s32.totalorder %s75, %s77
      %p84 = scmp.eq.s32.totalorder %s34, 3
      %p85 = por %p83, %p84
      %p86 = scmp.ne.s32.totalorder %s77, %s78
      %p87 = scmp.eq.s32.totalorder %s34, 0
      %p88 = por %p86, %p87
      %p89 = scmp.ne.s32.totalorder %s77, %s78
      %p90 = scmp.eq.s32.totalorder %s35, 3
      %p91 = por %p89, %p90
      %p93 = scmp.ne.s32.totalorder %s78, %s92
      %p94 = scmp.eq.s32.totalorder %s35, 0
      %p95 = por %p93, %p94
      %s97 = sadd.s32 %s96, 1
      %p100 = scmp.eq.s32.totalorder %s29, 3
      %p101 = scmp.ne.s32.totalorder %s96, %s98
      %p102 = scmp.eq.s32.totalorder %s29, 0
      %p103 = por %p101, %p102
      %p104 = scmp.ne.s32.totalorder %s96, %s98
      %p105 = scmp.eq.s32.totalorder %s34, 3
      %p106 = por %p104, %p105
      %p107 = scmp.ne.s32.totalorder %s98, %s99
      %p108 = scmp.eq.s32.totalorder %s34, 0
      %p109 = por %p107, %p108
      %p110 = scmp.ne.s32.totalorder %s98, %s99
      %p111 = scmp.eq.s32.totalorder %s35, 3
      %p112 = por %p110, %p111
      %p114 = scmp.ne.s32.totalorder %s99, %s113
      %p115 = scmp.eq.s32.totalorder %s35, 0
      %p116 = por %p114, %p115
      %s118 = sadd.s32 %s117, 1
      %p121 = scmp.eq.s32.totalorder %s29, 3
      %p122 = scmp.ne.s32.totalorder %s117, %s119
      %p123 = scmp.eq.s32.totalorder %s29, 0
      %p124 = por %p122, %p123
      %p125 = scmp.ne.s32.totalorder %s117, %s119
      %p126 = scmp.eq.s32.totalorder %s34, 3
      %p127 = por %p125, %p126
      %p128 = scmp.ne.s32.totalorder %s119, %s120
      %p129 = scmp.eq.s32.totalorder %s34, 0
      %p130 = por %p128, %p129
      %p131 = scmp.ne.s32.totalorder %s119, %s120
      %p132 = scmp.eq.s32.totalorder %s35, 3
      %p133 = por %p131, %p132
      %p135 = scmp.ne.s32.totalorder %s120, %s134
      %p136 = scmp.eq.s32.totalorder %s35, 0
      %p137 = por %p135, %p136
      %s139 = sadd.s32 %s138, 1
      %p142 = scmp.eq.s32.totalorder %s29, 3
      %p143 = scmp.ne.s32.totalorder %s138, %s140
      %p144 = scmp.eq.s32.totalorder %s29, 0
      %p145 = por %p143, %p144
      %p146 = scmp.ne.s32.totalorder %s138, %s140
      %p147 = scmp.eq.s32.totalorder %s34, 3
      %p148 = por %p146, %p147
      %p149 = scmp.ne.s32.totalorder %s140, %s141
      %p150 = scmp.eq.s32.totalorder %s34, 0
      %p151 = por %p149, %p150
      %p152 = scmp.ne.s32.totalorder %s140, %s141
      %p153 = scmp.eq.s32.totalorder %s35, 3
      %p154 = por %p152, %p153
      %p156 = scmp.ne.s32.totalorder %s141, %s155
      %p157 = scmp.eq.s32.totalorder %s35, 0
      %p158 = por %p156, %p157
      %s160 = sadd.s32 %s159, 1
      %p163 = scmp.eq.s32.totalorder %s29, 3
      %p164 = scmp.ne.s32.totalorder %s159, %s161
      %p165 = scmp.eq.s32.totalorder %s29, 0
      %p166 = por %p164, %p165
      %p167 = scmp.ne.s32.totalorder %s159, %s161
      %p168 = scmp.eq.s32.totalorder %s34, 3
      %p169 = por %p167, %p168
      %p170 = scmp.ne.s32.totalorder %s161, %s162
      %p171 = scmp.eq.s32.totalorder %s34, 0
      %p172 = por %p170, %p171
      %p173 = scmp.ne.s32.totalorder %s161, %s162
      %p174 = scmp.eq.s32.totalorder %s35, 3
      %p175 = por %p173, %p174
      %p177 = scmp.ne.s32.totalorder %s162, %s176
      %p178 = scmp.eq.s32.totalorder %s35, 0
      %p179 = por %p177, %p178
      %s181 = sadd.s32 %s180, 1
      %p184 = scmp.eq.s32.totalorder %s29, 3
      %p185 = scmp.ne.s32.totalorder %s180, %s182
      %p186 = scmp.eq.s32.totalorder %s29, 0
      %p187 = por %p185, %p186
      %p188 = scmp.ne.s32.totalorder %s180, %s182
      %p189 = scmp.eq.s32.totalorder %s34, 3
      %p190 = por %p188, %p189
      %p191 = scmp.ne.s32.totalorder %s182, %s183
      %p192 = scmp.eq.s32.totalorder %s34, 0
      %p193 = por %p191, %p192
      %p194 = scmp.ne.s32.totalorder %s182, %s183
      %p195 = scmp.eq.s32.totalorder %s35, 3
      %p196 = por %p194, %p195
      %p198 = scmp.ne.s32.totalorder %s183, %s197
      %p199 = scmp.eq.s32.totalorder %s35, 0
      %p200 = por %p198, %p199
      %s202 = sadd.s32 %s201, 1
      %p205 = scmp.eq.s32.totalorder %s29, 3
      %p206 = scmp.ne.s32.totalorder %s201, %s203
      %p207 = scmp.eq.s32.totalorder %s29, 0
      %p208 = por %p206, %p207
      %p209 = scmp.ne.s32.totalorder %s201, %s203
      %p210 = scmp.eq.s32.totalorder %s34, 3
      %p211 = por %p209, %p210
      %p212 = scmp.ne.s32.totalorder %s203, %s204
      %p213 = scmp.eq.s32.totalorder %s34, 0
      %p214 = por %p212, %p213
      %p215 = scmp.ne.s32.totalorder %s203, %s204
      %p216 = scmp.eq.s32.totalorder %s35, 3
      %p217 = por %p215, %p216
      %p219 = scmp.ne.s32.totalorder %s204, %s218
      %p220 = scmp.eq.s32.totalorder %s35, 0
      %p221 = por %p219, %p220
      %s223 = sadd.s32 %s222, 1
      %p226 = scmp.eq.s32.totalorder %s29, 3
      %p227 = scmp.ne.s32.totalorder %s222, %s224
      %p228 = scmp.eq.s32.totalorder %s29, 0
      %p229 = por %p227, %p228
      %p230 = scmp.ne.s32.totalorder %s222, %s224
      %p231 = scmp.eq.s32.totalorder %s34, 3
      %p232 = por %p230, %p231
      %p233 = scmp.ne.s32.totalorder %s224, %s225
      %p234 = scmp.eq.s32.totalorder %s34, 0
      %p235 = por %p233, %p234
      %p236 = scmp.ne.s32.totalorder %s224, %s225
      %p237 = scmp.eq.s32.totalorder %s35, 3
      %p238 = por %p236, %p237
      %p240 = scmp.ne.s32.totalorder %s225, %s239
      %p241 = scmp.eq.s32.totalorder %s35, 0
      %p242 = por %p240, %p241
      %s243 = ssub.s32 %s37, %s44
      %p244 = scmp.eq.s32.totalorder %s243, 0
      %s246 = sadd.s32 %s245, 1
      %s247 = scalar_select %p244, %s245, %s246
      %p250 = pneg %p244
      %p251 = scmp.eq.s32.totalorder %s29, 3
      %p252 = por %p250, %p251
      %p253 = scmp.ne.s32.totalorder %s245, %s248
      %p254 = scmp.eq.s32.totalorder %s29, 0
      %p255 = por %p253, %p254
      %p256 = scmp.ne.s32.totalorder %s245, %s248
      %p257 = scmp.eq.s32.totalorder %s34, 3
      %p258 = por %p256, %p257
      %p259 = scmp.ne.s32.totalorder %s248, %s249
      %p260 = scmp.eq.s32.totalorder %s34, 0
      %p261 = por %p259, %p260
      %p262 = scmp.ne.s32.totalorder %s248, %s249
      %p263 = scmp.eq.s32.totalorder %s35, 3
      %p264 = por %p262, %p263
      %p266 = scmp.ne.s32.totalorder %s249, %s265
      %p267 = scmp.eq.s32.totalorder %s35, 0
      %p268 = por %p266, %p267
      %s269 = ssub.s32 %s37, %s44
      %p270 = scmp.eq.s32.totalorder %s269, 0
      %s272 = sadd.s32 %s271, 1
      %s273 = scalar_select %p270, %s271, %s272
      %p276 = pneg %p270
      %p277 = scmp.eq.s32.totalorder %s29, 3
      %p278 = por %p276, %p277
      %p279 = scmp.ne.s32.totalorder %s271, %s274
      %p280 = scmp.eq.s32.totalorder %s29, 0
      %p281 = por %p279, %p280
      %p282 = scmp.ne.s32.totalorder %s271, %s274
      %p283 = scmp.eq.s32.totalorder %s34, 3
      %p284 = por %p282, %p283
      %p285 = scmp.ne.s32.totalorder %s274, %s275
      %p286 = scmp.eq.s32.totalorder %s34, 0
      %p287 = por %p285, %p286
      %p288 = scmp.ne.s32.totalorder %s274, %s275
      %p289 = scmp.eq.s32.totalorder %s35, 3
      %p290 = por %p288, %p289
      %p292 = scmp.ne.s32.totalorder %s275, %s291
      %p293 = scmp.eq.s32.totalorder %s35, 0
      %p294 = por %p292, %p293
      %s295 = ssub.s32 %s37, %s44
      %p296 = scmp.eq.s32.totalorder %s295, 0
      %s298 = sadd.s32 %s297, 1
      %s299 = scalar_select %p296, %s297, %s298
      %p302 = pneg %p296
      %p303 = scmp.eq.s32.totalorder %s29, 3
      %p304 = por %p302, %p303
      %p305 = scmp.ne.s32.totalorder %s297, %s300
      %p306 = scmp.eq.s32.totalorder %s29, 0
      %p307 = por %p305, %p306
      %p308 = scmp.ne.s32.totalorder %s297, %s300
      %p309 = scmp.eq.s32.totalorder %s34, 3
      %p310 = por %p308, %p309
      %p311 = scmp.ne.s32.totalorder %s300, %s301
      %p312 = scmp.eq.s32.totalorder %s34, 0
      %p313 = por %p311, %p312
      %p314 = scmp.ne.s32.totalorder %s300, %s301
      %p315 = scmp.eq.s32.totalorder %s35, 3
      %p316 = por %p314, %p315
      %p318 = scmp.ne.s32.totalorder %s301, %s317
      %p319 = scmp.eq.s32.totalorder %s35, 0
      %p320 = por %p318, %p319
      %s322 = sadd.s32 %s321, 1
      %p325 = scmp.eq.s32.totalorder %s29, 3
      %p326 = scmp.ne.s32.totalorder %s321, %s323
      %p327 = scmp.eq.s32.totalorder %s29, 0
      %p328 = por %p326, %p327
      %p329 = scmp.ne.s32.totalorder %s321, %s323
      %p330 = scmp.eq.s32.totalorder %s34, 3
      %p331 = por %p329, %p330
      %p332 = scmp.ne.s32.totalorder %s323, %s324
      %p333 = scmp.eq.s32.totalorder %s34, 0
      %p334 = por %p332, %p333
      %p335 = scmp.ne.s32.totalorder %s323, %s324
      %p336 = scmp.eq.s32.totalorder %s35, 3
      %p337 = por %p335, %p336
      %p339 = scmp.ne.s32.totalorder %s324, %s338
      %p340 = scmp.eq.s32.totalorder %s35, 0
      %p341 = por %p339, %p340
      %s343 = sadd.s32 %s342, 1
      %p346 = scmp.eq.s32.totalorder %s29, 3
      %p347 = scmp.ne.s32.totalorder %s342, %s344
      %p348 = scmp.eq.s32.totalorder %s29, 0
      %p349 = por %p347, %p348
      %p350 = scmp.ne.s32.totalorder %s342, %s344
      %p351 = scmp.eq.s32.totalorder %s34, 3
      %p352 = por %p350, %p351
      %p353 = scmp.ne.s32.totalorder %s344, %s345
      %p354 = scmp.eq.s32.totalorder %s34, 0
      %p355 = por %p353, %p354
      %p356 = scmp.ne.s32.totalorder %s344, %s345
      %p357 = scmp.eq.s32.totalorder %s35, 3
      %p358 = por %p356, %p357
      %p360 = scmp.ne.s32.totalorder %s345, %s359
      %p361 = scmp.eq.s32.totalorder %s35, 0
      %p362 = por %p360, %p361
      %s364 = sadd.s32 %s363, 1
      %p367 = scmp.eq.s32.totalorder %s29, 3
      %p368 = scmp.ne.s32.totalorder %s363, %s365
      %p369 = scmp.eq.s32.totalorder %s29, 0
      %p370 = por %p368, %p369
      %p371 = scmp.ne.s32.totalorder %s363, %s365
      %p372 = scmp.eq.s32.totalorder %s34, 3
      %p373 = por %p371, %p372
      %p374 = scmp.ne.s32.totalorder %s365, %s366
      %p375 = scmp.eq.s32.totalorder %s34, 0
      %p376 = por %p374, %p375
      %p377 = scmp.ne.s32.totalorder %s365, %s366
      %p378 = scmp.eq.s32.totalorder %s35, 3
      %p379 = por %p377, %p378
      %p381 = scmp.ne.s32.totalorder %s366, %s380
      %p382 = scmp.eq.s32.totalorder %s35, 0
      %p383 = por %p381, %p382
      %s385 = sadd.s32 %s384, 1
      %p388 = scmp.eq.s32.totalorder %s29, 3
      %p389 = scmp.ne.s32.totalorder %s384, %s386
      %p390 = scmp.eq.s32.totalorder %s29, 0
      %p391 = por %p389, %p390
      %p392 = scmp.ne.s32.totalorder %s384, %s386
      %p393 = scmp.eq.s32.totalorder %s34, 3
      %p394 = por %p392, %p393
      %p395 = scmp.ne.s32.totalorder %s386, %s387
      %p396 = scmp.eq.s32.totalorder %s34, 0
      %p397 = por %p395, %p396
      %p398 = scmp.ne.s32.totalorder %s386, %s387
      %p399 = scmp.eq.s32.totalorder %s35, 3
      %p400 = por %p398, %p399
      %p402 = scmp.ne.s32.totalorder %s387, %s401
      %p403 = scmp.eq.s32.totalorder %s35, 0
      %p404 = por %p402, %p403
      %s405 = ssub.s32 %s36, %s48
      %p406 = scmp.eq.s32.totalorder %s405, 0
      %s408 = sadd.s32 %s407, 1
      %s409 = scalar_select %p406, %s407, %s408
      %p412 = pneg %p406
      %p413 = scmp.eq.s32.totalorder %s29, 3
      %p414 = por %p412, %p413
      %p415 = scmp.ne.s32.totalorder %s407, %s410
      %p416 = scmp.eq.s32.totalorder %s29, 0
      %p417 = por %p415, %p416
      %p418 = scmp.ne.s32.totalorder %s407, %s410
      %p419 = scmp.eq.s32.totalorder %s34, 3
      %p420 = por %p418, %p419
      %p421 = scmp.ne.s32.totalorder %s410, %s411
      %p422 = scmp.eq.s32.totalorder %s34, 0
      %p423 = por %p421, %p422
      %p424 = scmp.ne.s32.totalorder %s410, %s411
      %p425 = scmp.eq.s32.totalorder %s35, 3
      %p426 = por %p424, %p425
      %p428 = scmp.ne.s32.totalorder %s411, %s427
      %p429 = scmp.eq.s32.totalorder %s35, 0
      %p430 = por %p428, %p429
      %p431 = scmp.le.s32.totalorder 1, %s29
      %p432 = scmp.lt.s32.totalorder %s29, 5
      %p433 = pnand %p431, %p432
      %p434 = pneg %p433
      // Predicated region
      $region9: #{tpu_custom_call.1} parent=5 // pred_check
        _
      $region10: #{tpu_custom_call.1} parent=5 // pred_check_branch
        %436 = sbr.rel (%p433) target = $region12
      $region11: #{tpu_custom_call.1} parent=5 // pred_region
        %s437 = ssub.s32 %s29, 1
        // Predicated region
        $region13: #{tpu_custom_call.1} parent=11 // pred_check
          %p438 = pneg %p88
        $region14: #{tpu_custom_call.1} parent=11 // pred_check_branch
          %440 = sbr.rel (%p438) target = $region16
        $region15: #{tpu_custom_call.1} parent=11 // pred_region
          %442 = vsyncadd [#allocation4], 0
          %s444 = sshll.u32 %s1, 4
          %s445 = int_to_ptr.hbm [resolvable:$true] %s444
          %s446 = sshll.u32 [#allocation3], 4
          %s447 = int_to_ptr.vmem [resolvable:$true] %s446
          %449 = dma.hbm_to_vmem [thread:$0]  %s445, 16, %s447, [#allocation4]
        $region16: #{tpu_custom_call.1} parent=11 // pred_fallthru
          _
        // Predicated region
        $region17: #{tpu_custom_call.1} parent=11 // pred_check
          %p450 = pneg %p109
        $region18: #{tpu_custom_call.1} parent=11 // pred_check_branch
          %452 = sbr.rel (%p450) target = $region20
        $region19: #{tpu_custom_call.1} parent=11 // pred_region
          %454 = vsyncadd [#allocation7], 0
          %s456 = sshll.u32 %s2, 4
          %s457 = int_to_ptr.hbm [resolvable:$true] %s456
          %s458 = sshll.u32 [#allocation6], 4
          %s459 = int_to_ptr.vmem [resolvable:$true] %s458
          %461 = dma.hbm_to_vmem [thread:$0]  %s457, 16, %s459, [#allocation7]
        $region20: #{tpu_custom_call.1} parent=11 // pred_fallthru
          _
        // Predicated region
        $region21: #{tpu_custom_call.1} parent=11 // pred_check
          %p462 = pneg %p130
        $region22: #{tpu_custom_call.1} parent=11 // pred_check_branch
          %464 = sbr.rel (%p462) target = $region24
        $region23: #{tpu_custom_call.1} parent=11 // pred_region
          _
        $region24: #{tpu_custom_call.1} parent=11 // pred_fallthru
          _
        // Predicated region
        $region25: #{tpu_custom_call.1} parent=11 // pred_check
          %p465 = pneg %p151
        $region26: #{tpu_custom_call.1} parent=11 // pred_check_branch
          %467 = sbr.rel (%p465) target = $region28
        $region27: #{tpu_custom_call.1} parent=11 // pred_region
          %469 = vsyncadd [#allocation7], 0
          %s471 = sshll.u32 %s4, 4
          %s472 = int_to_ptr.hbm [resolvable:$true] %s471
          %s473 = sshll.u32 [#allocation8], 4
          %s474 = int_to_ptr.vmem [resolvable:$true] %s473
          %476 = dma.hbm_to_vmem [thread:$0]  %s472, 32, %s474, [#allocation7]
        $region28: #{tpu_custom_call.1} parent=11 // pred_fallthru
          _
        // Predicated region
        $region29: #{tpu_custom_call.1} parent=11 // pred_check
          %p477 = pneg %p172
        $region30: #{tpu_custom_call.1} parent=11 // pred_check_branch
          %479 = sbr.rel (%p477) target = $region32
        $region31: #{tpu_custom_call.1} parent=11 // pred_region
          _
        $region32: #{tpu_custom_call.1} parent=11 // pred_fallthru
          _
        // Predicated region
        $region33: #{tpu_custom_call.1} parent=11 // pred_check
          %p480 = pneg %p193
        $region34: #{tpu_custom_call.1} parent=11 // pred_check_branch
          %482 = sbr.rel (%p480) target = $region36
        $region35: #{tpu_custom_call.1} parent=11 // pred_region
          %484 = vsyncadd [#allocation10], 0
          %s486 = sshll.u32 %s6, 4
          %s487 = int_to_ptr.hbm [resolvable:$true] %s486
          %s488 = sshll.u32 [#allocation9], 4
          %s489 = int_to_ptr.vmem [resolvable:$true] %s488
          %491 = dma.hbm_to_vmem [thread:$0]  %s487, 16, %s489, [#allocation10]
        $region36: #{tpu_custom_call.1} parent=11 // pred_fallthru
          _
        // Predicated region
        $region37: #{tpu_custom_call.1} parent=11 // pred_check
          %p492 = pneg %p214
        $region38: #{tpu_custom_call.1} parent=11 // pred_check_branch
          %494 = sbr.rel (%p492) target = $region40
        $region39: #{tpu_custom_call.1} parent=11 // pred_region
          %496 = vsyncadd [#allocation10], 0
          %s498 = sshll.u32 %s7, 4
          %s499 = int_to_ptr.hbm [resolvable:$true] %s498
          %s500 = sshll.u32 [#allocation11], 4
          %s501 = int_to_ptr.vmem [resolvable:$true] %s500
          %503 = dma.hbm_to_vmem [thread:$0]  %s499, 16, %s501, [#allocation10]
        $region40: #{tpu_custom_call.1} parent=11 // pred_fallthru
          _
        // Predicated region
        $region41: #{tpu_custom_call.1} parent=11 // pred_check
          %p504 = pneg %p235
        $region42: #{tpu_custom_call.1} parent=11 // pred_check_branch
          %506 = sbr.rel (%p504) target = $region44
        $region43: #{tpu_custom_call.1} parent=11 // pred_region
          %508 = vsyncadd [#allocation13], 0
          %s510 = sshll.u32 %s8, 4
          %s511 = int_to_ptr.hbm [resolvable:$true] %s510
          %s512 = sshll.u32 [#allocation12], 4
          %s513 = int_to_ptr.vmem [resolvable:$true] %s512
          %515 = dma.hbm_to_vmem [thread:$0]  %s511, 16, %s513, [#allocation13]
        $region44: #{tpu_custom_call.1} parent=11 // pred_fallthru
          _
        // Predicated region
        $region45: #{tpu_custom_call.1} parent=11 // pred_check
          %p516 = pneg %p334
        $region46: #{tpu_custom_call.1} parent=11 // pred_check_branch
          %518 = sbr.rel (%p516) target = $region48
        $region47: #{tpu_custom_call.1} parent=11 // pred_region
          _
        $region48: #{tpu_custom_call.1} parent=11 // pred_fallthru
          _
        // Predicated region
        $region49: #{tpu_custom_call.1} parent=11 // pred_check
          %p519 = pneg %p355
        $region50: #{tpu_custom_call.1} parent=11 // pred_check_branch
          %521 = sbr.rel (%p519) target = $region52
        $region51: #{tpu_custom_call.1} parent=11 // pred_region
          _
        $region52: #{tpu_custom_call.1} parent=11 // pred_fallthru
          _
        // Predicated region
        $region53: #{tpu_custom_call.1} parent=11 // pred_check
          %p522 = pneg %p376
        $region54: #{tpu_custom_call.1} parent=11 // pred_check_branch
          %524 = sbr.rel (%p522) target = $region56
        $region55: #{tpu_custom_call.1} parent=11 // pred_region
          _
        $region56: #{tpu_custom_call.1} parent=11 // pred_fallthru
          _
        // Predicated region
        $region57: #{tpu_custom_call.1} parent=11 // pred_check
          %p525 = pneg %p397
        $region58: #{tpu_custom_call.1} parent=11 // pred_check_branch
          %527 = sbr.rel (%p525) target = $region60
        $region59: #{tpu_custom_call.1} parent=11 // pred_region
          _
        $region60: #{tpu_custom_call.1} parent=11 // pred_fallthru
          _
      $region12: #{tpu_custom_call.1} parent=5 // pred_fallthru
        _
      %p528 = scmp.lt.s32.totalorder %s29, 4
      // Predicated region
      $region61: #{tpu_custom_call.1} parent=5 // pred_check
        %p529 = pneg %p528
      $region62: #{tpu_custom_call.1} parent=5 // pred_check_branch
        %531 = sbr.rel (%p529) target = $region64
      $region63: #{tpu_custom_call.1} parent=5 // pred_region
        // Predicated region
        $region65: #{tpu_custom_call.1} parent=63 // pred_check
          %p532 = pneg %p61
        $region66: #{tpu_custom_call.1} parent=63 // pred_check_branch
          %534 = sbr.rel (%p532) target = $region68
        $region67: #{tpu_custom_call.1} parent=63 // pred_region
          %p535 = scmp.lt.s32.totalorder %s36, 1
          %s536 = scalar_select %p535, %s36, 1
          %s537 = smul.addr %s536, 8
          %s538 = scalar_lea.vmem %s0, %s537
        $region68: #{tpu_custom_call.1} parent=63 // pred_fallthru
          _
        // Predicated region
        $region69: #{tpu_custom_call.1} parent=63 // pred_check
          %p539 = pneg %p255
        $region70: #{tpu_custom_call.1} parent=63 // pred_check_branch
          %541 = sbr.rel (%p539) target = $region72
        $region71: #{tpu_custom_call.1} parent=63 // pred_region
          %s542 = sand.u32 %s245, 1
          %s543 = sand.u32 %s245, 1
          %s544 = smul.addr %s543, 32
          %s545 = scalar_lea.vmem [#allocation14], %s544
          %s546 = smul.addr %s37, 4
          %s547 = scalar_lea.vmem %s9, %s546
          // Predicated region
          $region73: #{tpu_custom_call.1} parent=71 // pred_check
            _
          $region74: #{tpu_custom_call.1} parent=71 // pred_check_branch
            %549 = sbr.rel (0) target = $region76
          $region75: #{tpu_custom_call.1} parent=71 // pred_region
            // Predicated region
            $region77: #{tpu_custom_call.1} parent=75 // pred_check
              _
            $region78: #{tpu_custom_call.1} parent=75 // pred_check_branch
              %551 = sbr.rel target = $region80
            $region79: #{tpu_custom_call.1} parent=75 // pred_region
              // Predicated region
              $region92: #{tpu_custom_call.1} parent=79 // pred_check
                _
              $region93: #{tpu_custom_call.1} parent=79 // pred_check_branch
                %581 = sbr.rel (0) target = $region95
              $region94: #{tpu_custom_call.1} parent=79 // pred_region
                loop: start=0, step=1, limit=1
                $region96: #{tpu_custom_call.1} parent=94 // loop_pre_header
                  _
                $region97: #{tpu_custom_call.1} parent=94 // loop_header
                  %s583 = sphi 0, %s587
                  %p584 = scmp.ge.s32.totalorder %s583, 1
                  %s588 = sphi %s547, %s547
                  %s589 = sphi %s545, %s545
                $region98: #{tpu_custom_call.1} parent=94 // loop_header_branch
                  %586 = sbr.rel (%p584) target = $region102
                $region99: #{tpu_custom_call.1} parent=94 // loop_body
                  _
                $region100: #{tpu_custom_call.1} parent=94 // loop_footer
                  %s587 = sadd.s32 1, %s583
                $region101: #{tpu_custom_call.1} parent=94 // loop_footer_branch
                  %582 = sbr.rel target = $region97
                $region102: #{tpu_custom_call.1} parent=94 // loop_exit
                  _
                %s591 = ssub.s32 16, 1
                loop: start=0, step=1, limit=1
                $region103: #{tpu_custom_call.1} parent=94 // loop_pre_header
                  _
                $region104: #{tpu_custom_call.1} parent=94 // loop_header
                  %s593 = sphi 0, %s597
                  %p594 = scmp.ge.s32.totalorder %s593, 1
                  %s598 = sphi %s547, %s547
                  %s599 = sphi %s545, %s545
                $region105: #{tpu_custom_call.1} parent=94 // loop_header_branch
                  %596 = sbr.rel (%p594) target = $region109
                $region106: #{tpu_custom_call.1} parent=94 // loop_body
                  %v600 = vld [vmem:[%s598] sm:%s591]
                  %601 = vst [vmem:[%s599] sm:%s591] %v600
                  %v602 = vld [vmem:[%s598 + $0x8] sm:%s591]
                  %603 = vst [vmem:[%s599 + $0x4] sm:%s591] %v602
                  %v604 = vld [vmem:[%s598 + $0x10] sm:%s591]
                  %605 = vst [vmem:[%s599 + $0x8] sm:%s591] %v604
                  %v606 = vld [vmem:[%s598 + $0x18] sm:%s591]
                  %607 = vst [vmem:[%s599 + $0xc] sm:%s591] %v606
                  %v608 = vld [vmem:[%s598 + $0x20] sm:%s591]
                  %609 = vst [vmem:[%s599 + $0x10] sm:%s591] %v608
                  %v610 = vld [vmem:[%s598 + $0x28] sm:%s591]
                  %611 = vst [vmem:[%s599 + $0x14] sm:%s591] %v610
                  %v612 = vld [vmem:[%s598 + $0x30] sm:%s591]
                  %613 = vst [vmem:[%s599 + $0x18] sm:%s591] %v612
                  %v614 = vld [vmem:[%s598 + $0x38] sm:%s591]
                  %615 = vst [vmem:[%s599 + $0x1c] sm:%s591] %v614
                $region107: #{tpu_custom_call.1} parent=94 // loop_footer
                  %s597 = sadd.s32 1, %s593
                $region108: #{tpu_custom_call.1} parent=94 // loop_footer_branch
                  %592 = sbr.rel target = $region104
                $region109: #{tpu_custom_call.1} parent=94 // loop_exit
                  _
              $region95: #{tpu_custom_call.1} parent=79 // pred_fallthru
                _
            $region80: #{tpu_custom_call.1} parent=75 // pred_fallthru
              _
            // Predicated region
            $region81: #{tpu_custom_call.1} parent=75 // pred_check
              _
            $region82: #{tpu_custom_call.1} parent=75 // pred_check_branch
              %553 = sbr.rel (0) target = $region84
            $region83: #{tpu_custom_call.1} parent=75 // pred_region
              %s555 = ssub.s32 16, 1
              loop: start=0, step=1, limit=1
              $region85: #{tpu_custom_call.1} parent=83 // loop_pre_header
                _
              $region86: #{tpu_custom_call.1} parent=83 // loop_header
                %s557 = sphi 0, %s561
                %p558 = scmp.ge.s32.totalorder %s557, 1
                %s562 = sphi %s547, %s547
                %s563 = sphi %s545, %s545
              $region87: #{tpu_custom_call.1} parent=83 // loop_header_branch
                %560 = sbr.rel (%p558) target = $region91
              $region88: #{tpu_custom_call.1} parent=83 // loop_body
                %v564 = vld [vmem:[%s562] sm:%s555]
                %565 = vst [vmem:[%s563] sm:%s555] %v564
                %v566 = vld [vmem:[%s562 + $0x8] sm:%s555]
                %567 = vst [vmem:[%s563 + $0x4] sm:%s555] %v566
                %v568 = vld [vmem:[%s562 + $0x10] sm:%s555]
                %569 = vst [vmem:[%s563 + $0x8] sm:%s555] %v568
                %v570 = vld [vmem:[%s562 + $0x18] sm:%s555]
                %571 = vst [vmem:[%s563 + $0xc] sm:%s555] %v570
                %v572 = vld [vmem:[%s562 + $0x20] sm:%s555]
                %573 = vst [vmem:[%s563 + $0x10] sm:%s555] %v572
                %v574 = vld [vmem:[%s562 + $0x28] sm:%s555]
                %575 = vst [vmem:[%s563 + $0x14] sm:%s555] %v574
                %v576 = vld [vmem:[%s562 + $0x30] sm:%s555]
                %577 = vst [vmem:[%s563 + $0x18] sm:%s555] %v576
                %v578 = vld [vmem:[%s562 + $0x38] sm:%s555]
                %579 = vst [vmem:[%s563 + $0x1c] sm:%s555] %v578
              $region89: #{tpu_custom_call.1} parent=83 // loop_footer
                %s561 = sadd.s32 1, %s557
              $region90: #{tpu_custom_call.1} parent=83 // loop_footer_branch
                %556 = sbr.rel target = $region86
              $region91: #{tpu_custom_call.1} parent=83 // loop_exit
                _
            $region84: #{tpu_custom_call.1} parent=75 // pred_fallthru
              _
          $region76: #{tpu_custom_call.1} parent=71 // pred_fallthru
            _
          %616 = vnop
        $region72: #{tpu_custom_call.1} parent=63 // pred_fallthru
          _
        // Predicated region
        $region110: #{tpu_custom_call.1} parent=63 // pred_check
          %p617 = pneg %p281
        $region111: #{tpu_custom_call.1} parent=63 // pred_check_branch
          %619 = sbr.rel (%p617) target = $region113
        $region112: #{tpu_custom_call.1} parent=63 // pred_region
          %s620 = sand.u32 %s29, 1
          %s621 = scalar_lea.sflag [#allocation4], %s620
          %s622 = sand.u32 %s271, 1
          %s623 = scalar_lea.vmem [#allocation15], %s622
          %625 = vsyncadd %s621, 0
          %s626 = scalar_lea.hbm %s10, %s37
          %s628 = sshll.u32 %s626, 4
          %s629 = int_to_ptr.hbm [resolvable:$true] %s628
          %s630 = sshll.u32 %s623, 4
          %s631 = int_to_ptr.vmem [resolvable:$true] %s630
          %633 = dma.hbm_to_vmem [thread:$0]  %s629, 16, %s631, %s621
        $region113: #{tpu_custom_call.1} parent=63 // pred_fallthru
          _
        // Predicated region
        $region114: #{tpu_custom_call.1} parent=63 // pred_check
          %p634 = pneg %p307
        $region115: #{tpu_custom_call.1} parent=63 // pred_check_branch
          %636 = sbr.rel (%p634) target = $region117
        $region116: #{tpu_custom_call.1} parent=63 // pred_region
          %s637 = smul.u32 16, %s37
          %p638 = scmp.lt.s32.totalorder %s637, 31
          %s639 = scalar_select %p638, %s637, 31
          %s640 = smul.addr %s639, 4
          %s641 = scalar_lea.vmem %s11, %s640
          %s642 = smul.u32 16, %s37
        $region117: #{tpu_custom_call.1} parent=63 // pred_fallthru
          _
      $region64: #{tpu_custom_call.1} parent=5 // pred_fallthru
        _
      %p643 = scmp.le.s32.totalorder 1, %s29
      %p644 = scmp.lt.s32.totalorder %s29, 5
      %p645 = pnand %p643, %p644
      %p646 = pneg %p645
      // Predicated region
      $region118: #{tpu_custom_call.1} parent=5 // pred_check
        _
      $region119: #{tpu_custom_call.1} parent=5 // pred_check_branch
        %648 = sbr.rel (%p645) target = $region121
      $region120: #{tpu_custom_call.1} parent=5 // pred_region
        %s649 = ssub.s32 %s29, 1
        // Predicated region
        $region122: #{tpu_custom_call.1} parent=120 // pred_check
          %p650 = pneg %p88
        $region123: #{tpu_custom_call.1} parent=120 // pred_check_branch
          %652 = sbr.rel (%p650) target = $region125
        $region124: #{tpu_custom_call.1} parent=120 // pred_region
          %654 = dma.done [#allocation4], 16
        $region125: #{tpu_custom_call.1} parent=120 // pred_fallthru
          _
        // Predicated region
        $region126: #{tpu_custom_call.1} parent=120 // pred_check
          %p655 = pneg %p109
        $region127: #{tpu_custom_call.1} parent=120 // pred_check_branch
          %657 = sbr.rel (%p655) target = $region129
        $region128: #{tpu_custom_call.1} parent=120 // pred_region
          %659 = dma.done [#allocation7], 16
        $region129: #{tpu_custom_call.1} parent=120 // pred_fallthru
          _
        // Predicated region
        $region130: #{tpu_custom_call.1} parent=120 // pred_check
          %p660 = pneg %p151
        $region131: #{tpu_custom_call.1} parent=120 // pred_check_branch
          %662 = sbr.rel (%p660) target = $region133
        $region132: #{tpu_custom_call.1} parent=120 // pred_region
          %664 = dma.done [#allocation7], 32
        $region133: #{tpu_custom_call.1} parent=120 // pred_fallthru
          _
        // Predicated region
        $region134: #{tpu_custom_call.1} parent=120 // pred_check
          %p665 = pneg %p193
        $region135: #{tpu_custom_call.1} parent=120 // pred_check_branch
          %667 = sbr.rel (%p665) target = $region137
        $region136: #{tpu_custom_call.1} parent=120 // pred_region
          %669 = dma.done [#allocation10], 16
        $region137: #{tpu_custom_call.1} parent=120 // pred_fallthru
          _
        // Predicated region
        $region138: #{tpu_custom_call.1} parent=120 // pred_check
          %p670 = pneg %p214
        $region139: #{tpu_custom_call.1} parent=120 // pred_check_branch
          %672 = sbr.rel (%p670) target = $region141
        $region140: #{tpu_custom_call.1} parent=120 // pred_region
          %674 = dma.done [#allocation10], 16
        $region141: #{tpu_custom_call.1} parent=120 // pred_fallthru
          _
        // Predicated region
        $region142: #{tpu_custom_call.1} parent=120 // pred_check
          %p675 = pneg %p235
        $region143: #{tpu_custom_call.1} parent=120 // pred_check_branch
          %677 = sbr.rel (%p675) target = $region145
        $region144: #{tpu_custom_call.1} parent=120 // pred_region
          %679 = dma.done [#allocation13], 16
        $region145: #{tpu_custom_call.1} parent=120 // pred_fallthru
          _
        %s680 = sand.u32 %s248, 1
        %s681 = sand.u32 %s248, 1
        %s682 = smul.addr %s681, 32
        %s683 = scalar_lea.vmem [#allocation14], %s682
        // Predicated region
        $region146: #{tpu_custom_call.1} parent=120 // pred_check
          %p684 = pneg %p261
        $region147: #{tpu_custom_call.1} parent=120 // pred_check_branch
          %686 = sbr.rel (%p684) target = $region149
        $region148: #{tpu_custom_call.1} parent=120 // pred_region
          _
        $region149: #{tpu_custom_call.1} parent=120 // pred_fallthru
          _
        %s687 = sand.u32 %s34, 1
        %s688 = scalar_lea.sflag [#allocation4], %s687
        %s689 = sand.u32 %s274, 1
        %s690 = scalar_lea.vmem [#allocation15], %s689
        // Predicated region
        $region150: #{tpu_custom_call.1} parent=120 // pred_check
          %p691 = pneg %p287
        $region151: #{tpu_custom_call.1} parent=120 // pred_check_branch
          %693 = sbr.rel (%p691) target = $region153
        $region152: #{tpu_custom_call.1} parent=120 // pred_region
          %695 = dma.done %s688, 16
        $region153: #{tpu_custom_call.1} parent=120 // pred_fallthru
          _
        %p696 = scmp.lt.s32.totalorder %s38, 1
        %s697 = scalar_select %p696, %s38, 1
        %s698 = smul.addr %s697, 8
        %s699 = scalar_lea.vmem %s0, %s698
        %p700 = pneg %p67
        %p701 = pneg %p64
        %p702 = pneg %p88
        %p703 = pneg %p85
        %p704 = pneg %p109
        %p705 = pneg %p106
        %p706 = pneg %p130
        %p707 = pneg %p127
        %p708 = pneg %p151
        %p709 = pneg %p148
        %p710 = pneg %p172
        %p711 = pneg %p169
        %p712 = pneg %p193
        %p713 = pneg %p190
        %p714 = pneg %p214
        %p715 = pneg %p211
        %p716 = pneg %p235
        %p717 = pneg %p232
        %s718 = sand.u32 %s248, 1
        %s719 = sand.u32 %s248, 1
        %s720 = smul.addr %s719, 32
        %s721 = scalar_lea.vmem [#allocation14], %s720
        %p722 = pneg %p261
        %p723 = pneg %p258
        %s724 = sand.u32 %s34, 1
        %s725 = scalar_lea.sflag [#allocation4], %s724
        %s726 = sand.u32 %s274, 1
        %s727 = scalar_lea.vmem [#allocation15], %s726
        %p728 = pneg %p287
        %p729 = pneg %p284
        %s730 = smul.u32 16, %s39
        %p731 = scmp.lt.s32.totalorder %s730, 31
        %s732 = scalar_select %p731, %s730, 31
        %s733 = smul.addr %s732, 4
        %s734 = scalar_lea.vmem %s11, %s733
        %p735 = pneg %p313
        %p736 = pneg %p310
        %p737 = pneg %p334
        %p738 = pneg %p331
        %p739 = pneg %p355
        %p740 = pneg %p352
        %p741 = pneg %p376
        %p742 = pneg %p373
        %p743 = pneg %p397
        %p744 = pneg %p394
        %p745 = pneg %p423
        %p746 = pneg %p420
        %s747 = sand.u32 %s410, 1
        %s748 = scalar_lea.sflag [#allocation5], %s747
        %s749 = sand.u32 %s410, 1
        %s750 = smul.addr %s749, 8
        %s751 = scalar_lea.vmem [#allocation16], %s750
        %p752 = scmp.lt.s32.totalorder %s38, 1
        %s753 = scalar_select %p752, %s38, 1
        %s754 = smul.addr %s753, 8
        %s755 = scalar_lea.vmem %s0, %s754
        %s756 = smul.u32 16, %s39
        %p757 = scmp.lt.s32.totalorder %s756, 31
        %s758 = scalar_select %p757, %s756, 31
        %s759 = smul.addr %s758, 4
        %s760 = scalar_lea.vmem %s11, %s759
        %s761 = smul.u32 16, %s39
        %p763 = scmp.eq.s32.totalorder %s39, 0
        // Predicated region
        $region154: #{tpu_custom_call.1} parent=120 // pred_check
          %p764 = pneg %p763
        $region155: #{tpu_custom_call.1} parent=120 // pred_check_branch
          %766 = sbr.rel (%p764) target = $region157
        $region156: #{tpu_custom_call.1} parent=120 // pred_region
          %v767 = vld [vmem:[%s755] sm:$0xff]
          %vm768 = vcmask 523264
          %v769 = vsel %vm768, %v767, 0.0
          %770 = vadd.xlane.f32.xlu0 %v769
          %v771 = vpop.xlane.xlu0 %770
          %v772 = vrcp.pop 64.0
          %v773 = vmul.f32 64.0, %v772
          %v774 = vsub.f32 1.0, %v773
          %v775 = vmul.f32 %v772, %v774
          %v776 = vadd.f32 %v772, %v775
          %vm777 = vweird.f32 %v772
          %v778 = vsel %vm777, %v772, %v776
          %v779 = vmul.f32 %v771, %v778
          %v780 = vsub.f32 %v767, %v779
          %v781 = vmul.f32 %v780, %v780
          %v782 = vsel %vm768, %v781, 0.0
          %783 = vadd.xlane.f32.xlu0 %v782
          %v784 = vpop.xlane.xlu0 %783
          %v785 = vmul.f32 %v784, %v778
          %v786 = vadd.f32 %v785, 1e-05
          %v787 = vrsqrt.pop %v786
          %v788 = vmul.f32 %v787, %v786
          %v789 = vmul.f32 %v788, %v787
          %v790 = vmul.f32 0.5, %v789
          %v791 = vsub.f32 1.5, %v790
          %v792 = vmul.f32 %v787, %v791
          %vm793 = vweird.f32 %v786
          %vm794 = vweird.f32 %v787
          %vm795 = vmor %vm793, %vm794
          %v796 = vsel %vm795, %v787, %v792
          %v797 = vmul.f32 %v780, %v796
          %v798 = vld [vmem:[#allocation3] sm:$0x1]
          %v800 = vperm.slane %v798, 0
          %v802 = vmul.f32 %v797, %v800
          %v803 = vld [vmem:[#allocation6] sm:$0x1]
          %v805 = vperm.slane %v803, 0
          %v807 = vadd.f32 %v802, %v805
          %v808 = vld [vmem:[#allocation11] sm:$0x1]
          %v810 = vperm.slane %v808, 0
          %v812 = vmul.f32 %v797, %v810
          %v813 = vld [vmem:[#allocation12] sm:$0x1]
          %v815 = vperm.slane %v813, 0
          %v817 = vadd.f32 %v812, %v815
          %v818 = vpack.c.bf16 %v817, %v817
          %vm819 = vcmask 519168
          %820 = vst.msk [vmem:[#allocation2] sm:$0xf] %vm819, %v818
          %v821 = vpack.c.bf16 %v807, %v807
          %v822 = vld [vmem:[%s3] sm:$0xff]
          %v823 = vld [vmem:[%s3 + $0x8] sm:$0xff]
          %v824 = vld [vmem:[%s3 + $0x10] sm:$0xff]
          %v825 = vld [vmem:[%s3 + $0x18] sm:$0xff]
          %v826 = vld [vmem:[%s3 + $0x20] sm:$0xff]
          %v827 = vld [vmem:[%s3 + $0x28] sm:$0xff]
          %v828 = vld [vmem:[%s3 + $0x30] sm:$0xff]
          %v829 = vld [vmem:[%s3 + $0x38] sm:$0xff]
          %v830 = vld [vmem:[#allocation8] sm:$0x3]
          %v832 = vperm.slane %v830, 0
          %v833 = vperm.slane %v830, 1
          %v844 = vunpack.c.l.b16 %v822
          %v845 = vunpack.c.h.b16 %v822
          %v846 = vunpack.c.l.b16 %v823
          %v847 = vunpack.c.h.b16 %v823
          %v848 = vunpack.c.l.b16 %v824
          %v849 = vunpack.c.h.b16 %v824
          %v850 = vunpack.c.l.b16 %v825
          %v851 = vunpack.c.h.b16 %v825
          %v852 = vunpack.c.l.b16 %v826
          %v853 = vunpack.c.h.b16 %v826
          %v854 = vunpack.c.l.b16 %v827
          %v855 = vunpack.c.h.b16 %v827
          %v856 = vunpack.c.l.b16 %v828
          %v857 = vunpack.c.h.b16 %v828
          %v858 = vunpack.c.l.b16 %v829
          %v859 = vunpack.c.h.b16 %v829
          %v860 = vpack.c.b16 %v846, %v844
          %v861 = vpack.c.b16 %v847, %v845
          %v862 = vpack.c.b16 %v850, %v848
          %v863 = vpack.c.b16 %v851, %v849
          %v864 = vpack.c.b16 %v854, %v852
          %v865 = vpack.c.b16 %v855, %v853
          %v866 = vpack.c.b16 %v858, %v856
          %v867 = vpack.c.b16 %v859, %v857
          %v877 = vsel %vm768, %v821, 0
          %879 = vmatpush.bf16.msra.mxu0 0
          %880 = vmatpush.bf16.msra.mxu0 0
          %881 = vmatpush.bf16.msra.mxu0 0
          %882 = vmatpush.bf16.msra.mxu0 0
          %883 = vmatpush.bf16.msra.mxu0 %v866
          %884 = vmatpush.bf16.msra.mxu0 %v864
          %885 = vmatpush.bf16.msra.mxu0 %v862
          %886 = vmatpush.bf16.msra.mxu0 %v860
          %887 = vmatmul.bf16.gmra.mxu0 %v877
          %v888 = vpop.f32.mrf.mxu0
          %v889 = vadd.f32 %v832, %v888
          %v890 = vpop.f32.mrf.mxu0
          %891 = vdwg.mxu0
          %892 = vmatpush.bf16.msra.mxu0 0
          %893 = vmatpush.bf16.msra.mxu0 0
          %894 = vmatpush.bf16.msra.mxu0 0
          %895 = vmatpush.bf16.msra.mxu0 0
          %896 = vmatpush.bf16.msra.mxu0 %v867
          %897 = vmatpush.bf16.msra.mxu0 %v865
          %898 = vmatpush.bf16.msra.mxu0 %v863
          %899 = vmatpush.bf16.msra.mxu0 %v861
          %900 = vmatmul.bf16.gmra.mxu0 %v877
          %v901 = vpop.f32.mrf.mxu0
          %v902 = vadd.f32 %v833, %v901
          %v903 = vpop.f32.mrf.mxu0
          %904 = vdwg.mxu0
          %v905 = vmul.f32 %v889, 0.25
          %v906 = vld [vmem:[%s13] sm:$0xff]
          %v907 = vld [vmem:[%s14] sm:$0xff]
          %v908 = vld [vmem:[%s15] sm:$0xff]
          %v909 = vmul.f32 %v905, %v906
          %vm910 = vcmask 1048064
          %911 = vrot.lane.b32.xlu0 %v905, 64
          %v912 = vpop.permute.xlu0 %911
          %v913 = vsel %vm910, %v912, %v905
          %914 = vrot.lane.b32.xlu0 %v913, 64
          %v915 = vpop.permute.xlu0 %914
          %v916 = vsel %vm910, %v915, %v905
          %918 = vrot.lane.b32.xlu0 %v907, 2
          %v919 = vpop.permute.xlu0 %918
          %v921 = vmul.f32 %v916, %v919
          %923 = vrot.lane.b32.xlu0 %v921, 126
          %v924 = vpop.permute.xlu0 %923
          %v926 = vadd.f32 %v909, %v924
          %928 = vrot.lane.b32.xlu0 %v908, 62
          %v929 = vpop.permute.xlu0 %928
          %v931 = vmul.f32 %v916, %v929
          %933 = vrot.lane.b32.xlu0 %v931, 66
          %v934 = vpop.permute.xlu0 %933
          %v936 = vadd.f32 %v926, %v934
          %938 = vrot.lane.b32.xlu0 %v906, 64
          %v939 = vpop.permute.xlu0 %938
          %v941 = vmul.f32 %v889, %v939
          %943 = vrot.lane.b32.xlu0 %v889, 64
          %v944 = vpop.permute.xlu0 %943
          %946 = vrot.lane.b32.xlu0 %v944, 64
          %v947 = vpop.permute.xlu0 %946
          %v948 = vsel %vm910, %v947, %v944
          %949 = vrot.lane.b32.xlu0 %v948, 64
          %v950 = vpop.permute.xlu0 %949
          %v951 = vsel %vm910, %v950, %v944
          %v952 = vmul.f32 %v951, %v919
          %954 = vrot.lane.b32.xlu0 %v952, 62
          %v955 = vpop.permute.xlu0 %954
          %v957 = vadd.f32 %v941, %v955
          %v958 = vmul.f32 %v951, %v929
          %960 = vrot.lane.b32.xlu0 %v958, 2
          %v961 = vpop.permute.xlu0 %960
          %v963 = vadd.f32 %v957, %v961
          %965 = vrot.lane.b32.xlu0 %v936, 112
          %v966 = vpop.permute.xlu0 %965
          %968 = vrot.lane.b32.xlu0 %v936, 96
          %v969 = vpop.permute.xlu0 %968
          %971 = vrot.lane.b32.xlu0 %v936, 80
          %v972 = vpop.permute.xlu0 %971
          %v974 = vrot.slane %v969, 4
          %vm975 = vcmask 1047556
          %v976 = vsel %vm975, %v974, %v936
          %v977 = vrot.slane %v936, 4
          %v978 = vsel %vm975, %v969, %v977
          %v980 = vunpack.c.l.s4 1983009808
          %v981 = vunpack.c.0.s8 %v980
          %v982 = vperm.slane %v976, %v981
          %v984 = vunpack.c.l.s4 1983009808
          %v985 = vunpack.c.0.s8 %v984
          %v986 = vperm.slane %v978, %v985
          %v987 = vrot.slane %v972, 4
          %v988 = vsel %vm975, %v987, %v966
          %v989 = vrot.slane %v966, 4
          %v990 = vsel %vm975, %v972, %v989
          %v992 = vunpack.c.l.s4 1983009808
          %v993 = vunpack.c.0.s8 %v992
          %v994 = vperm.slane %v988, %v993
          %v996 = vunpack.c.l.s4 1983009808
          %v997 = vunpack.c.0.s8 %v996
          %v998 = vperm.slane %v990, %v997
          %v999 = vrot.slane %v994, 4
          %v1000 = vsel %vm975, %v999, %v982
          %v1001 = vrot.slane %v982, 4
          %v1002 = vsel %vm975, %v994, %v1001
          %v1004 = vunpack.c.l.s4 1934713408
          %v1005 = vunpack.c.0.s8 %v1004
          %v1006 = vperm.slane %v1000, %v1005
          %v1008 = vunpack.c.l.s4 1934713408
          %v1009 = vunpack.c.0.s8 %v1008
          %v1010 = vperm.slane %v1002, %v1009
          %v1011 = vrot.slane %v998, 4
          %v1012 = vsel %vm975, %v1011, %v986
          %v1013 = vrot.slane %v986, 4
          %v1014 = vsel %vm975, %v998, %v1013
          %v1016 = vunpack.c.l.s4 1934713408
          %v1017 = vunpack.c.0.s8 %v1016
          %v1018 = vperm.slane %v1012, %v1017
          %v1020 = vunpack.c.l.s4 1934713408
          %v1021 = vunpack.c.0.s8 %v1020
          %v1022 = vperm.slane %v1014, %v1021
          %v1023 = vrot.slane %v1006, 4
          %v1024 = vsel %vm975, 0.0, %v1023
          %v1025 = vrot.slane %v1010, 4
          %v1026 = vsel %vm975, 0.0, %v1025
          %v1027 = vrot.slane %v1018, 4
          %v1028 = vsel %vm975, 0.0, %v1027
          %v1029 = vrot.slane %v1022, 4
          %v1030 = vsel %vm975, 0.0, %v1029
          %v1031 = vsel %vm975, %v1025, %v1006
          %v1033 = vunpack.c.l.s4 1983009808
          %v1034 = vunpack.c.0.s8 %v1033
          %v1035 = vperm.slane %v1031, %v1034
          %v1036 = vrot.slane %v1026, 4
          %v1037 = vsel %vm975, %v1036, %v1024
          %v1039 = vunpack.c.l.s4 1983009808
          %v1040 = vunpack.c.0.s8 %v1039
          %v1041 = vperm.slane %v1037, %v1040
          %v1042 = vsel %vm975, %v1029, %v1018
          %v1044 = vunpack.c.l.s4 1983009808
          %v1045 = vunpack.c.0.s8 %v1044
          %v1046 = vperm.slane %v1042, %v1045
          %v1047 = vrot.slane %v1030, 4
          %v1048 = vsel %vm975, %v1047, %v1028
          %v1050 = vunpack.c.l.s4 1983009808
          %v1051 = vunpack.c.0.s8 %v1050
          %v1052 = vperm.slane %v1048, %v1051
          %v1053 = vrot.slane %v1041, 4
          %v1054 = vsel %vm975, %v1053, %v1035
          %v1055 = vrot.slane %v1035, 4
          %v1056 = vsel %vm975, %v1041, %v1055
          %v1058 = vunpack.c.l.s4 1934713408
          %v1059 = vunpack.c.0.s8 %v1058
          %v1060 = vperm.slane %v1054, %v1059
          %v1062 = vunpack.c.l.s4 1934713408
          %v1063 = vunpack.c.0.s8 %v1062
          %v1064 = vperm.slane %v1056, %v1063
          %v1065 = vrot.slane %v1052, 4
          %v1066 = vsel %vm975, %v1065, %v1046
          %v1067 = vrot.slane %v1046, 4
          %v1068 = vsel %vm975, %v1052, %v1067
          %v1070 = vunpack.c.l.s4 1934713408
          %v1071 = vunpack.c.0.s8 %v1070
          %v1072 = vperm.slane %v1066, %v1071
          %v1074 = vunpack.c.l.s4 1934713408
          %v1075 = vunpack.c.0.s8 %v1074
          %v1076 = vperm.slane %v1068, %v1075
          %v1077 = vrot.slane %v1072, 4
          %v1078 = vsel %vm975, %v1077, %v1060
          %v1079 = vrot.slane %v1060, 4
          %v1080 = vsel %vm975, %v1072, %v1079
          %v1081 = vrot.slane %v1076, 4
          %v1082 = vsel %vm975, %v1081, %v1064
          %v1083 = vrot.slane %v1064, 4
          %v1084 = vsel %vm975, %v1076, %v1083
          %v1085 = vpack.c.bf16 %v1078, %v1078
          %v1086 = vpack.c.bf16 %v1080, %v1080
          %v1087 = vpack.c.bf16 %v1082, %v1082
          %v1088 = vpack.c.bf16 %v1084, %v1084
          %1090 = vrot.lane.b32.xlu0 %v963, 112
          %v1091 = vpop.permute.xlu0 %1090
          %1092 = vrot.lane.b32.xlu0 %v963, 96
          %v1093 = vpop.permute.xlu0 %1092
          %1094 = vrot.lane.b32.xlu0 %v963, 80
          %v1095 = vpop.permute.xlu0 %1094
          %1096 = vrot.lane.b32.xlu0 %v963, 64
          %v1097 = vpop.permute.xlu0 %1096
          %1098 = vrot.lane.b32.xlu0 %v1091, 64
          %v1099 = vpop.permute.xlu0 %1098
          %1100 = vrot.lane.b32.xlu0 %v1093, 64
          %v1101 = vpop.permute.xlu0 %1100
          %1102 = vrot.lane.b32.xlu0 %v1095, 64
          %v1103 = vpop.permute.xlu0 %1102
          %v1108 = vrot.slane %v1101, 4
          %v1109 = vsel %vm975, %v1108, %v1097
          %v1110 = vrot.slane %v1097, 4
          %v1111 = vsel %vm975, %v1101, %v1110
          %v1113 = vunpack.c.l.s4 1983009808
          %v1114 = vunpack.c.0.s8 %v1113
          %v1115 = vperm.slane %v1109, %v1114
          %v1117 = vunpack.c.l.s4 1983009808
          %v1118 = vunpack.c.0.s8 %v1117
          %v1119 = vperm.slane %v1111, %v1118
          %v1120 = vrot.slane %v1103, 4
          %v1121 = vsel %vm975, %v1120, %v1099
          %v1122 = vrot.slane %v1099, 4
          %v1123 = vsel %vm975, %v1103, %v1122
          %v1125 = vunpack.c.l.s4 1983009808
          %v1126 = vunpack.c.0.s8 %v1125
          %v1127 = vperm.slane %v1121, %v1126
          %v1129 = vunpack.c.l.s4 1983009808
          %v1130 = vunpack.c.0.s8 %v1129
          %v1131 = vperm.slane %v1123, %v1130
          %v1132 = vrot.slane %v1127, 4
          %v1133 = vsel %vm975, %v1132, %v1115
          %v1134 = vrot.slane %v1115, 4
          %v1135 = vsel %vm975, %v1127, %v1134
          %v1137 = vunpack.c.l.s4 1934713408
          %v1138 = vunpack.c.0.s8 %v1137
          %v1139 = vperm.slane %v1133, %v1138
          %v1141 = vunpack.c.l.s4 1934713408
          %v1142 = vunpack.c.0.s8 %v1141
          %v1143 = vperm.slane %v1135, %v1142
          %v1144 = vrot.slane %v1131, 4
          %v1145 = vsel %vm975, %v1144, %v1119
          %v1146 = vrot.slane %v1119, 4
          %v1147 = vsel %vm975, %v1131, %v1146
          %v1149 = vunpack.c.l.s4 1934713408
          %v1150 = vunpack.c.0.s8 %v1149
          %v1151 = vperm.slane %v1145, %v1150
          %v1153 = vunpack.c.l.s4 1934713408
          %v1154 = vunpack.c.0.s8 %v1153
          %v1155 = vperm.slane %v1147, %v1154
          %v1156 = vrot.slane %v1139, 4
          %v1157 = vsel %vm975, 0.0, %v1156
          %v1158 = vrot.slane %v1143, 4
          %v1159 = vsel %vm975, 0.0, %v1158
          %v1160 = vrot.slane %v1151, 4
          %v1161 = vsel %vm975, 0.0, %v1160
          %v1162 = vrot.slane %v1155, 4
          %v1163 = vsel %vm975, 0.0, %v1162
          %v1164 = vsel %vm975, %v1158, %v1139
          %v1166 = vunpack.c.l.s4 1983009808
          %v1167 = vunpack.c.0.s8 %v1166
          %v1168 = vperm.slane %v1164, %v1167
          %v1169 = vrot.slane %v1159, 4
          %v1170 = vsel %vm975, %v1169, %v1157
          %v1172 = vunpack.c.l.s4 1983009808
          %v1173 = vunpack.c.0.s8 %v1172
          %v1174 = vperm.slane %v1170, %v1173
          %v1175 = vsel %vm975, %v1162, %v1151
          %v1177 = vunpack.c.l.s4 1983009808
          %v1178 = vunpack.c.0.s8 %v1177
          %v1179 = vperm.slane %v1175, %v1178
          %v1180 = vrot.slane %v1163, 4
          %v1181 = vsel %vm975, %v1180, %v1161
          %v1183 = vunpack.c.l.s4 1983009808
          %v1184 = vunpack.c.0.s8 %v1183
          %v1185 = vperm.slane %v1181, %v1184
          %v1186 = vrot.slane %v1174, 4
          %v1187 = vsel %vm975, %v1186, %v1168
          %v1188 = vrot.slane %v1168, 4
          %v1189 = vsel %vm975, %v1174, %v1188
          %v1191 = vunpack.c.l.s4 1934713408
          %v1192 = vunpack.c.0.s8 %v1191
          %v1193 = vperm.slane %v1187, %v1192
          %v1195 = vunpack.c.l.s4 1934713408
          %v1196 = vunpack.c.0.s8 %v1195
          %v1197 = vperm.slane %v1189, %v1196
          %v1198 = vrot.slane %v1185, 4
          %v1199 = vsel %vm975, %v1198, %v1179
          %v1200 = vrot.slane %v1179, 4
          %v1201 = vsel %vm975, %v1185, %v1200
          %v1203 = vunpack.c.l.s4 1934713408
          %v1204 = vunpack.c.0.s8 %v1203
          %v1205 = vperm.slane %v1199, %v1204
          %v1207 = vunpack.c.l.s4 1934713408
          %v1208 = vunpack.c.0.s8 %v1207
          %v1209 = vperm.slane %v1201, %v1208
          %v1210 = vrot.slane %v1205, 4
          %v1211 = vsel %vm975, %v1210, %v1193
          %v1212 = vrot.slane %v1193, 4
          %v1213 = vsel %vm975, %v1205, %v1212
          %v1214 = vrot.slane %v1209, 4
          %v1215 = vsel %vm975, %v1214, %v1197
          %v1216 = vrot.slane %v1197, 4
          %v1217 = vsel %vm975, %v1209, %v1216
          %v1218 = vpack.c.bf16 %v1211, %v1211
          %v1219 = vpack.c.bf16 %v1213, %v1213
          %v1220 = vpack.c.bf16 %v1215, %v1215
          %v1221 = vpack.c.bf16 %v1217, %v1217
          %1223 = vrot.lane.b32.xlu0 %v902, 112
          %v1224 = vpop.permute.xlu0 %1223
          %1226 = vrot.lane.b32.xlu0 %v902, 96
          %v1227 = vpop.permute.xlu0 %1226
          %1229 = vrot.lane.b32.xlu0 %v902, 80
          %v1230 = vpop.permute.xlu0 %1229
          %v1232 = vrot.slane %v1227, 4
          %v1233 = vsel %vm975, %v1232, %v902
          %v1234 = vrot.slane %v902, 4
          %v1235 = vsel %vm975, %v1227, %v1234
          %v1237 = vunpack.c.l.s4 1983009808
          %v1238 = vunpack.c.0.s8 %v1237
          %v1239 = vperm.slane %v1233, %v1238
          %v1241 = vunpack.c.l.s4 1983009808
          %v1242 = vunpack.c.0.s8 %v1241
          %v1243 = vperm.slane %v1235, %v1242
          %v1244 = vrot.slane %v1230, 4
          %v1245 = vsel %vm975, %v1244, %v1224
          %v1246 = vrot.slane %v1224, 4
          %v1247 = vsel %vm975, %v1230, %v1246
          %v1249 = vunpack.c.l.s4 1983009808
          %v1250 = vunpack.c.0.s8 %v1249
          %v1251 = vperm.slane %v1245, %v1250
          %v1253 = vunpack.c.l.s4 1983009808
          %v1254 = vunpack.c.0.s8 %v1253
          %v1255 = vperm.slane %v1247, %v1254
          %v1256 = vrot.slane %v1251, 4
          %v1257 = vsel %vm975, %v1256, %v1239
          %v1258 = vrot.slane %v1239, 4
          %v1259 = vsel %vm975, %v1251, %v1258
          %v1261 = vunpack.c.l.s4 1934713408
          %v1262 = vunpack.c.0.s8 %v1261
          %v1263 = vperm.slane %v1257, %v1262
          %v1265 = vunpack.c.l.s4 1934713408
          %v1266 = vunpack.c.0.s8 %v1265
          %v1267 = vperm.slane %v1259, %v1266
          %v1268 = vrot.slane %v1255, 4
          %v1269 = vsel %vm975, %v1268, %v1243
          %v1270 = vrot.slane %v1243, 4
          %v1271 = vsel %vm975, %v1255, %v1270
          %v1273 = vunpack.c.l.s4 1934713408
          %v1274 = vunpack.c.0.s8 %v1273
          %v1275 = vperm.slane %v1269, %v1274
          %v1277 = vunpack.c.l.s4 1934713408
          %v1278 = vunpack.c.0.s8 %v1277
          %v1279 = vperm.slane %v1271, %v1278
          %v1280 = vrot.slane %v1263, 4
          %v1281 = vsel %vm975, 0.0, %v1280
          %v1282 = vrot.slane %v1267, 4
          %v1283 = vsel %vm975, 0.0, %v1282
          %v1284 = vrot.slane %v1275, 4
          %v1285 = vsel %vm975, 0.0, %v1284
          %v1286 = vrot.slane %v1279, 4
          %v1287 = vsel %vm975, 0.0, %v1286
          %v1288 = vsel %vm975, %v1282, %v1263
          %v1290 = vunpack.c.l.s4 1983009808
          %v1291 = vunpack.c.0.s8 %v1290
          %v1292 = vperm.slane %v1288, %v1291
          %v1293 = vrot.slane %v1283, 4
          %v1294 = vsel %vm975, %v1293, %v1281
          %v1296 = vunpack.c.l.s4 1983009808
          %v1297 = vunpack.c.0.s8 %v1296
          %v1298 = vperm.slane %v1294, %v1297
          %v1299 = vsel %vm975, %v1286, %v1275
          %v1301 = vunpack.c.l.s4 1983009808
          %v1302 = vunpack.c.0.s8 %v1301
          %v1303 = vperm.slane %v1299, %v1302
          %v1304 = vrot.slane %v1287, 4
          %v1305 = vsel %vm975, %v1304, %v1285
          %v1307 = vunpack.c.l.s4 1983009808
          %v1308 = vunpack.c.0.s8 %v1307
          %v1309 = vperm.slane %v1305, %v1308
          %v1310 = vrot.slane %v1298, 4
          %v1311 = vsel %vm975, %v1310, %v1292
          %v1312 = vrot.slane %v1292, 4
          %v1313 = vsel %vm975, %v1298, %v1312
          %v1315 = vunpack.c.l.s4 1934713408
          %v1316 = vunpack.c.0.s8 %v1315
          %v1317 = vperm.slane %v1311, %v1316
          %v1319 = vunpack.c.l.s4 1934713408
          %v1320 = vunpack.c.0.s8 %v1319
          %v1321 = vperm.slane %v1313, %v1320
          %v1322 = vrot.slane %v1309, 4
          %v1323 = vsel %vm975, %v1322, %v1303
          %v1324 = vrot.slane %v1303, 4
          %v1325 = vsel %vm975, %v1309, %v1324
          %v1327 = vunpack.c.l.s4 1934713408
          %v1328 = vunpack.c.0.s8 %v1327
          %v1329 = vperm.slane %v1323, %v1328
          %v1331 = vunpack.c.l.s4 1934713408
          %v1332 = vunpack.c.0.s8 %v1331
          %v1333 = vperm.slane %v1325, %v1332
          %v1334 = vrot.slane %v1329, 4
          %v1335 = vsel %vm975, %v1334, %v1317
          %v1336 = vrot.slane %v1317, 4
          %v1337 = vsel %vm975, %v1329, %v1336
          %v1338 = vrot.slane %v1333, 4
          %v1339 = vsel %vm975, %v1338, %v1321
          %v1340 = vrot.slane %v1321, 4
          %v1341 = vsel %vm975, %v1333, %v1340
          %v1342 = vpack.c.bf16 %v1335, %v1335
          %v1343 = vpack.c.bf16 %v1337, %v1337
          %v1344 = vpack.c.bf16 %v1339, %v1339
          %v1345 = vpack.c.bf16 %v1341, %v1341
          %v1346 = vlaneseq
          %v1347 = vshrl.u32 %v1346, 7
          %v1348 = vlaneseq
          %v1349 = vand.u32 %v1348, 127
          %vm1350 = vcmp.ge.s32.totalorder %v1347, %v1349
          %v1351 = vsel %vm1350, 0.0, -1e+30
          %vm1352 = vcmask 130048
          %v1354 = vsel %vm1352, %v1085, 0
          %v1357 = vsel %vm1352, %v1218, 0
          %1359 = vmatpush.bf16.xpose.msra.mxu0 0
          %1360 = vmatpush.bf16.xpose.msra.mxu0 0
          %1361 = vmatpush.bf16.xpose.msra.mxu0 0
          %1362 = vmatpush.bf16.xpose.msra.mxu0 0
          %1363 = vmatpush.bf16.xpose.msra.mxu0 0
          %1364 = vmatpush.bf16.xpose.msra.mxu0 0
          %1365 = vmatpush.bf16.xpose.msra.mxu0 0
          %1366 = vmatpush.bf16.xpose.msra.mxu0 %v1357
          %1367 = vmatmul.bf16.gmra.mxu0 %v1354
          %v1368 = vpop.f32.mrf.mxu0
          %v1369 = vadd.f32 %v1351, %v1368
          %v1370 = vpop.f32.mrf.mxu0
          %1371 = vdwg.mxu0
          %v1373 = vsel %vm1352, %v1086, 0
          %v1376 = vsel %vm1352, %v1219, 0
          %1378 = vmatpush.bf16.xpose.msra.mxu0 0
          %1379 = vmatpush.bf16.xpose.msra.mxu0 0
          %1380 = vmatpush.bf16.xpose.msra.mxu0 0
          %1381 = vmatpush.bf16.xpose.msra.mxu0 0
          %1382 = vmatpush.bf16.xpose.msra.mxu0 0
          %1383 = vmatpush.bf16.xpose.msra.mxu0 0
          %1384 = vmatpush.bf16.xpose.msra.mxu0 0
          %1385 = vmatpush.bf16.xpose.msra.mxu0 %v1376
          %1386 = vmatmul.bf16.gmra.mxu0 %v1373
          %v1387 = vpop.f32.mrf.mxu0
          %v1388 = vadd.f32 %v1351, %v1387
          %v1389 = vpop.f32.mrf.mxu0
          %1390 = vdwg.mxu0
          %v1392 = vsel %vm1352, %v1087, 0
          %v1395 = vsel %vm1352, %v1220, 0
          %1397 = vmatpush.bf16.xpose.msra.mxu0 0
          %1398 = vmatpush.bf16.xpose.msra.mxu0 0
          %1399 = vmatpush.bf16.xpose.msra.mxu0 0
          %1400 = vmatpush.bf16.xpose.msra.mxu0 0
          %1401 = vmatpush.bf16.xpose.msra.mxu0 0
          %1402 = vmatpush.bf16.xpose.msra.mxu0 0
          %1403 = vmatpush.bf16.xpose.msra.mxu0 0
          %1404 = vmatpush.bf16.xpose.msra.mxu0 %v1395
          %1405 = vmatmul.bf16.gmra.mxu0 %v1392
          %v1406 = vpop.f32.mrf.mxu0
          %v1407 = vadd.f32 %v1351, %v1406
          %v1408 = vpop.f32.mrf.mxu0
          %1409 = vdwg.mxu0
          %v1411 = vsel %vm1352, %v1088, 0
          %v1414 = vsel %vm1352, %v1221, 0
          %1416 = vmatpush.bf16.xpose.msra.mxu0 0
          %1417 = vmatpush.bf16.xpose.msra.mxu0 0
          %1418 = vmatpush.bf16.xpose.msra.mxu0 0
          %1419 = vmatpush.bf16.xpose.msra.mxu0 0
          %1420 = vmatpush.bf16.xpose.msra.mxu0 0
          %1421 = vmatpush.bf16.xpose.msra.mxu0 0
          %1422 = vmatpush.bf16.xpose.msra.mxu0 0
          %1423 = vmatpush.bf16.xpose.msra.mxu0 %v1414
          %1424 = vmatmul.bf16.gmra.mxu0 %v1411
          %v1425 = vpop.f32.mrf.mxu0
          %v1426 = vadd.f32 %v1351, %v1425
          %v1427 = vpop.f32.mrf.mxu0
          %1428 = vdwg.mxu0
          %vm1429 = vcmask 64512
          %v1430 = vsel %vm1429, %v1369, -inf
          %1431 = vmax.xlane.f32.xlu0 %v1430
          %v1432 = vpop.xlane.xlu0 %1431
          %v1433 = vsel %vm1429, %v1388, -inf
          %1434 = vmax.xlane.f32.xlu0 %v1433
          %v1435 = vpop.xlane.xlu0 %1434
          %v1436 = vsel %vm1429, %v1407, -inf
          %1437 = vmax.xlane.f32.xlu0 %v1436
          %v1438 = vpop.xlane.xlu0 %1437
          %v1439 = vsel %vm1429, %v1426, -inf
          %1440 = vmax.xlane.f32.xlu0 %v1439
          %v1441 = vpop.xlane.xlu0 %1440
          %v1442 = vsub.f32 %v1369, %v1432
          %v1443 = vsub.f32 %v1388, %v1435
          %v1444 = vsub.f32 %v1407, %v1438
          %v1445 = vsub.f32 %v1426, %v1441
          %v1446 = vmul.f32 %v1442, 1.442695
          %v1447 = vpow.pop %v1446
          %v1448 = vmul.f32 %v1443, 1.442695
          %v1449 = vpow.pop %v1448
          %v1450 = vmul.f32 %v1444, 1.442695
          %v1451 = vpow.pop %v1450
          %v1452 = vmul.f32 %v1445, 1.442695
          %v1453 = vpow.pop %v1452
          %v1454 = vsel %vm1429, %v1447, 0.0
          %1455 = vadd.xlane.f32.xlu0 %v1454
          %v1456 = vpop.xlane.xlu0 %1455
          %v1457 = vsel %vm1429, %v1449, 0.0
          %1458 = vadd.xlane.f32.xlu0 %v1457
          %v1459 = vpop.xlane.xlu0 %1458
          %v1460 = vsel %vm1429, %v1451, 0.0
          %1461 = vadd.xlane.f32.xlu0 %v1460
          %v1462 = vpop.xlane.xlu0 %1461
          %v1463 = vsel %vm1429, %v1453, 0.0
          %1464 = vadd.xlane.f32.xlu0 %v1463
          %v1465 = vpop.xlane.xlu0 %1464
          %v1466 = vrcp.pop %v1456
          %v1467 = vrcp.pop %v1459
          %v1468 = vrcp.pop %v1462
          %v1469 = vrcp.pop %v1465
          %v1470 = vmul.f32 %v1447, %v1466
          %v1471 = vmul.f32 %v1449, %v1467
          %v1472 = vmul.f32 %v1451, %v1468
          %v1473 = vmul.f32 %v1453, %v1469
          %v1474 = vpack.c.bf16 %v1470, %v1470
          %v1475 = vpack.c.bf16 %v1471, %v1471
          %v1476 = vpack.c.bf16 %v1472, %v1472
          %v1477 = vpack.c.bf16 %v1473, %v1473
          %v1479 = vsel %vm1429, %v1474, 0
          %vm1481 = vcmask 1043456
          %v1483 = vsel %vm1481, %v1342, 0
          %1485 = vmatpush.bf16.msra.mxu0 0
          %1486 = vmatpush.bf16.msra.mxu0 0
          %1487 = vmatpush.bf16.msra.mxu0 0
          %1488 = vmatpush.bf16.msra.mxu0 0
          %1489 = vmatpush.bf16.msra.mxu0 0
          %1490 = vmatpush.bf16.msra.mxu0 0
          %1491 = vmatpush.bf16.msra.mxu0 0
          %1492 = vmatpush.bf16.msra.mxu0 %v1483
          %1493 = vmatmul.bf16.gmra.mxu0 %v1479
          %v1494 = vpop.f32.mrf.mxu0
          %v1495 = vadd.f32 0.0, %v1494
          %v1496 = vpop.f32.mrf.mxu0
          %1497 = vdwg.mxu0
          %v1499 = vsel %vm1429, %v1475, 0
          %v1502 = vsel %vm1481, %v1343, 0
          %1504 = vmatpush.bf16.msra.mxu0 0
          %1505 = vmatpush.bf16.msra.mxu0 0
          %1506 = vmatpush.bf16.msra.mxu0 0
          %1507 = vmatpush.bf16.msra.mxu0 0
          %1508 = vmatpush.bf16.msra.mxu0 0
          %1509 = vmatpush.bf16.msra.mxu0 0
          %1510 = vmatpush.bf16.msra.mxu0 0
          %1511 = vmatpush.bf16.msra.mxu0 %v1502
          %1512 = vmatmul.bf16.gmra.mxu0 %v1499
          %v1513 = vpop.f32.mrf.mxu0
          %v1514 = vadd.f32 0.0, %v1513
          %v1515 = vpop.f32.mrf.mxu0
          %1516 = vdwg.mxu0
          %v1518 = vsel %vm1429, %v1476, 0
          %v1521 = vsel %vm1481, %v1344, 0
          %1523 = vmatpush.bf16.msra.mxu0 0
          %1524 = vmatpush.bf16.msra.mxu0 0
          %1525 = vmatpush.bf16.msra.mxu0 0
          %1526 = vmatpush.bf16.msra.mxu0 0
          %1527 = vmatpush.bf16.msra.mxu0 0
          %1528 = vmatpush.bf16.msra.mxu0 0
          %1529 = vmatpush.bf16.msra.mxu0 0
          %1530 = vmatpush.bf16.msra.mxu0 %v1521
          %1531 = vmatmul.bf16.gmra.mxu0 %v1518
          %v1532 = vpop.f32.mrf.mxu0
          %v1533 = vadd.f32 0.0, %v1532
          %v1534 = vpop.f32.mrf.mxu0
          %1535 = vdwg.mxu0
          %v1537 = vsel %vm1429, %v1477, 0
          %v1540 = vsel %vm1481, %v1345, 0
          %1542 = vmatpush.bf16.msra.mxu0 0
          %1543 = vmatpush.bf16.msra.mxu0 0
          %1544 = vmatpush.bf16.msra.mxu0 0
          %1545 = vmatpush.bf16.msra.mxu0 0
          %1546 = vmatpush.bf16.msra.mxu0 0
          %1547 = vmatpush.bf16.msra.mxu0 0
          %1548 = vmatpush.bf16.msra.mxu0 0
          %1549 = vmatpush.bf16.msra.mxu0 %v1540
          %1550 = vmatmul.bf16.gmra.mxu0 %v1537
          %v1551 = vpop.f32.mrf.mxu0
          %v1552 = vadd.f32 0.0, %v1551
          %v1553 = vpop.f32.mrf.mxu0
          %1554 = vdwg.mxu0
          %v1555 = vrot.slane %v1533, 4
          %v1556 = vsel %vm975, %v1555, %v1495
          %v1557 = vrot.slane %v1495, 4
          %v1558 = vsel %vm975, %v1533, %v1557
          %v1560 = vunpack.c.l.s4 1983009808
          %v1561 = vunpack.c.0.s8 %v1560
          %v1562 = vperm.slane %v1556, %v1561
          %v1564 = vunpack.c.l.s4 1983009808
          %v1565 = vunpack.c.0.s8 %v1564
          %v1566 = vperm.slane %v1558, %v1565
          %v1567 = vrot.slane %v1552, 4
          %v1568 = vsel %vm975, %v1567, %v1514
          %v1569 = vrot.slane %v1514, 4
          %v1570 = vsel %vm975, %v1552, %v1569
          %v1572 = vunpack.c.l.s4 1983009808
          %v1573 = vunpack.c.0.s8 %v1572
          %v1574 = vperm.slane %v1568, %v1573
          %v1576 = vunpack.c.l.s4 1983009808
          %v1577 = vunpack.c.0.s8 %v1576
          %v1578 = vperm.slane %v1570, %v1577
          %v1579 = vrot.slane %v1574, 4
          %v1580 = vsel %vm975, %v1579, %v1562
          %v1581 = vrot.slane %v1562, 4
          %v1582 = vsel %vm975, %v1574, %v1581
          %v1584 = vunpack.c.l.s4 1934713408
          %v1585 = vunpack.c.0.s8 %v1584
          %v1586 = vperm.slane %v1580, %v1585
          %v1588 = vunpack.c.l.s4 1934713408
          %v1589 = vunpack.c.0.s8 %v1588
          %v1590 = vperm.slane %v1582, %v1589
          %v1591 = vrot.slane %v1578, 4
          %v1592 = vsel %vm975, %v1591, %v1566
          %v1593 = vrot.slane %v1566, 4
          %v1594 = vsel %vm975, %v1578, %v1593
          %v1596 = vunpack.c.l.s4 1934713408
          %v1597 = vunpack.c.0.s8 %v1596
          %v1598 = vperm.slane %v1592, %v1597
          %v1600 = vunpack.c.l.s4 1934713408
          %v1601 = vunpack.c.0.s8 %v1600
          %v1602 = vperm.slane %v1594, %v1601
          %v1603 = vrot.slane %v1586, 4
          %v1604 = vsel %vm975, 0.0, %v1603
          %v1605 = vrot.slane %v1590, 4
          %v1606 = vsel %vm975, 0.0, %v1605
          %v1607 = vrot.slane %v1598, 4
          %v1608 = vsel %vm975, 0.0, %v1607
          %v1609 = vrot.slane %v1602, 4
          %v1610 = vsel %vm975, 0.0, %v1609
          %v1611 = vsel %vm975, %v1605, %v1586
          %v1613 = vunpack.c.l.s4 1983009808
          %v1614 = vunpack.c.0.s8 %v1613
          %v1615 = vperm.slane %v1611, %v1614
          %v1616 = vrot.slane %v1606, 4
          %v1617 = vsel %vm975, %v1616, %v1604
          %v1619 = vunpack.c.l.s4 1983009808
          %v1620 = vunpack.c.0.s8 %v1619
          %v1621 = vperm.slane %v1617, %v1620
          %v1622 = vsel %vm975, %v1609, %v1598
          %v1624 = vunpack.c.l.s4 1983009808
          %v1625 = vunpack.c.0.s8 %v1624
          %v1626 = vperm.slane %v1622, %v1625
          %v1627 = vrot.slane %v1610, 4
          %v1628 = vsel %vm975, %v1627, %v1608
          %v1630 = vunpack.c.l.s4 1983009808
          %v1631 = vunpack.c.0.s8 %v1630
          %v1632 = vperm.slane %v1628, %v1631
          %v1633 = vrot.slane %v1621, 4
          %v1634 = vsel %vm975, %v1633, %v1615
          %v1635 = vrot.slane %v1615, 4
          %v1636 = vsel %vm975, %v1621, %v1635
          %v1638 = vunpack.c.l.s4 1934713408
          %v1639 = vunpack.c.0.s8 %v1638
          %v1640 = vperm.slane %v1634, %v1639
          %v1642 = vunpack.c.l.s4 1934713408
          %v1643 = vunpack.c.0.s8 %v1642
          %v1644 = vperm.slane %v1636, %v1643
          %v1645 = vrot.slane %v1632, 4
          %v1646 = vsel %vm975, %v1645, %v1626
          %v1647 = vrot.slane %v1626, 4
          %v1648 = vsel %vm975, %v1632, %v1647
          %v1650 = vunpack.c.l.s4 1934713408
          %v1651 = vunpack.c.0.s8 %v1650
          %v1652 = vperm.slane %v1646, %v1651
          %v1654 = vunpack.c.l.s4 1934713408
          %v1655 = vunpack.c.0.s8 %v1654
          %v1656 = vperm.slane %v1648, %v1655
          %v1657 = vrot.slane %v1652, 4
          %v1658 = vsel %vm975, %v1657, %v1640
          %v1659 = vrot.slane %v1640, 4
          %v1660 = vsel %vm975, %v1652, %v1659
          %v1661 = vrot.slane %v1656, 4
          %v1662 = vsel %vm975, %v1661, %v1644
          %v1663 = vrot.slane %v1644, 4
          %v1664 = vsel %vm975, %v1656, %v1663
          %1666 = vrot.lane.b32.xlu0 %v1660, 16
          %v1667 = vpop.permute.xlu0 %1666
          %1670 = vrot.lane.b32.xlu0 %v1662, 32
          %v1671 = vpop.permute.xlu0 %1670
          %1674 = vrot.lane.b32.xlu0 %v1664, 48
          %v1675 = vpop.permute.xlu0 %1674
          %v1677 = vsel %vm1352, %v1658, %v1667
          %vm1678 = vcmask 261120
          %v1679 = vsel %vm1678, %v1677, %v1671
          %vm1680 = vcmask 392192
          %v1681 = vsel %vm1680, %v1679, %v1675
          %v1682 = vpack.c.bf16 %v1681, %v1681
          %v1683 = vld [vmem:[%s5] sm:$0xf]
          %v1684 = vld [vmem:[%s5 + $0x4] sm:$0xf]
          %v1685 = vld [vmem:[%s5 + $0x8] sm:$0xf]
          %v1686 = vld [vmem:[%s5 + $0xc] sm:$0xf]
          %v1687 = vld [vmem:[%s5 + $0x10] sm:$0xf]
          %v1688 = vld [vmem:[%s5 + $0x14] sm:$0xf]
          %v1689 = vld [vmem:[%s5 + $0x18] sm:$0xf]
          %v1690 = vld [vmem:[%s5 + $0x1c] sm:$0xf]
          %v1691 = vld [vmem:[#allocation9] sm:$0x1]
          %v1693 = vperm.slane %v1691, 0
          %v1703 = vunpack.c.l.b16 %v1683
          %v1704 = vunpack.c.l.b16 %v1684
          %v1705 = vunpack.c.l.b16 %v1685
          %v1706 = vunpack.c.l.b16 %v1686
          %v1707 = vunpack.c.l.b16 %v1687
          %v1708 = vunpack.c.l.b16 %v1688
          %v1709 = vunpack.c.l.b16 %v1689
          %v1710 = vunpack.c.l.b16 %v1690
          %v1711 = vpack.c.b16 %v1704, %v1703
          %v1712 = vpack.c.b16 %v1706, %v1705
          %v1713 = vpack.c.b16 %v1708, %v1707
          %v1714 = vpack.c.b16 %v1710, %v1709
          %v1720 = vsel %vm768, %v1682, 0
          %1722 = vmatpush.bf16.msra.mxu0 0
          %1723 = vmatpush.bf16.msra.mxu0 0
          %1724 = vmatpush.bf16.msra.mxu0 0
          %1725 = vmatpush.bf16.msra.mxu0 0
          %1726 = vmatpush.bf16.msra.mxu0 %v1714
          %1727 = vmatpush.bf16.msra.mxu0 %v1713
          %1728 = vmatpush.bf16.msra.mxu0 %v1712
          %1729 = vmatpush.bf16.msra.mxu0 %v1711
          %1730 = vmatmul.bf16.gmra.mxu0 %v1720
          %v1731 = vpop.f32.mrf.mxu0
          %v1732 = vadd.f32 %v1693, %v1731
          %v1733 = vpop.f32.mrf.mxu0
          %1734 = vdwg.mxu0
          %v1735 = vadd.f32 %v767, %v1732
          %v1736 = vld [vmem:[%s12] sm:$0x1]
          %v1738 = vperm.slane %v1736, 0
          %v1740 = vadd.f32 %v1735, %v1738
          %1741 = vst.msk [vmem:[%s751] sm:$0xff] %vm768, %v1740
        $region157: #{tpu_custom_call.1} parent=120 // pred_fallthru
          _
        %v1742 = vld [vmem:[#allocation2] sm:$0xf]
        %v1743 = vld [vmem:[%s683] sm:$0xf]
        %v1744 = vld [vmem:[%s683 + $0x4] sm:$0xf]
        %v1745 = vld [vmem:[%s683 + $0x8] sm:$0xf]
        %v1746 = vld [vmem:[%s683 + $0xc] sm:$0xf]
        %v1747 = vld [vmem:[%s683 + $0x10] sm:$0xf]
        %v1748 = vld [vmem:[%s683 + $0x14] sm:$0xf]
        %v1749 = vld [vmem:[%s683 + $0x18] sm:$0xf]
        %v1750 = vld [vmem:[%s683 + $0x1c] sm:$0xf]
        %v1751 = vld [vmem:[%s690] sm:$0x1]
        %v1753 = vperm.slane %v1751, 0
        %v1763 = vunpack.c.l.b16 %v1743
        %v1764 = vunpack.c.l.b16 %v1744
        %v1765 = vunpack.c.l.b16 %v1745
        %v1766 = vunpack.c.l.b16 %v1746
        %v1767 = vunpack.c.l.b16 %v1747
        %v1768 = vunpack.c.l.b16 %v1748
        %v1769 = vunpack.c.l.b16 %v1749
        %v1770 = vunpack.c.l.b16 %v1750
        %v1771 = vpack.c.b16 %v1764, %v1763
        %v1772 = vpack.c.b16 %v1766, %v1765
        %v1773 = vpack.c.b16 %v1768, %v1767
        %v1774 = vpack.c.b16 %v1770, %v1769
        %vm1779 = vcmask 523264
        %v1781 = vsel %vm1779, %v1742, 0
        %1783 = vmatpush.bf16.msra.mxu0 0
        %1784 = vmatpush.bf16.msra.mxu0 0
        %1785 = vmatpush.bf16.msra.mxu0 0
        %1786 = vmatpush.bf16.msra.mxu0 0
        %1787 = vmatpush.bf16.msra.mxu0 %v1774
        %1788 = vmatpush.bf16.msra.mxu0 %v1773
        %1789 = vmatpush.bf16.msra.mxu0 %v1772
        %1790 = vmatpush.bf16.msra.mxu0 %v1771
        %1791 = vmatmul.bf16.gmra.mxu0 %v1781
        %v1792 = vpop.f32.mrf.mxu0
        %v1793 = vadd.f32 %v1753, %v1792
        %v1794 = vpop.f32.mrf.mxu0
        %1795 = vdwg.mxu0
        %v1796 = vmul.f32 %v1793, %v1793
        %v1797 = vmul.f32 %v1793, %v1796
        %v1798 = vmul.f32 %v1797, 0.044715
        %v1799 = vadd.f32 %v1793, %v1798
        %v1800 = vmul.f32 %v1799, 0.7978846
        %v1801 = vtanh.pop %v1800
        %v1802 = vadd.f32 %v1801, 1.0
        %v1803 = vmul.f32 %v1802, 0.5
        %v1804 = vmul.f32 %v1793, %v1803
        %v1805 = vld [vmem:[%s751] sm:$0xff]
        %v1806 = vpack.c.bf16 %v1804, %v1804
        %v1807 = vld [vmem:[%s760] sm:$0xf]
        %v1808 = vld [vmem:[%s760 + $0x4] sm:$0xf]
        %v1809 = vld [vmem:[%s760 + $0x8] sm:$0xf]
        %v1810 = vld [vmem:[%s760 + $0xc] sm:$0xf]
        %v1811 = vld [vmem:[%s760 + $0x10] sm:$0xf]
        %v1812 = vld [vmem:[%s760 + $0x14] sm:$0xf]
        %v1813 = vld [vmem:[%s760 + $0x18] sm:$0xf]
        %v1814 = vld [vmem:[%s760 + $0x1c] sm:$0xf]
        %v1815 = vld [vmem:[%s760 + $0x20] sm:$0xf]
        %v1816 = vld [vmem:[%s760 + $0x24] sm:$0xf]
        %v1817 = vld [vmem:[%s760 + $0x28] sm:$0xf]
        %v1818 = vld [vmem:[%s760 + $0x2c] sm:$0xf]
        %v1819 = vld [vmem:[%s760 + $0x30] sm:$0xf]
        %v1820 = vld [vmem:[%s760 + $0x34] sm:$0xf]
        %v1821 = vld [vmem:[%s760 + $0x38] sm:$0xf]
        %v1822 = vld [vmem:[%s760 + $0x3c] sm:$0xf]
        %v1839 = vunpack.c.l.b16 %v1807
        %v1840 = vunpack.c.l.b16 %v1808
        %v1841 = vunpack.c.l.b16 %v1809
        %v1842 = vunpack.c.l.b16 %v1810
        %v1843 = vunpack.c.l.b16 %v1811
        %v1844 = vunpack.c.l.b16 %v1812
        %v1845 = vunpack.c.l.b16 %v1813
        %v1846 = vunpack.c.l.b16 %v1814
        %v1847 = vunpack.c.l.b16 %v1815
        %v1848 = vunpack.c.l.b16 %v1816
        %v1849 = vunpack.c.l.b16 %v1817
        %v1850 = vunpack.c.l.b16 %v1818
        %v1851 = vunpack.c.l.b16 %v1819
        %v1852 = vunpack.c.l.b16 %v1820
        %v1853 = vunpack.c.l.b16 %v1821
        %v1854 = vunpack.c.l.b16 %v1822
        %v1855 = vpack.c.b16 %v1840, %v1839
        %v1856 = vpack.c.b16 %v1842, %v1841
        %v1857 = vpack.c.b16 %v1844, %v1843
        %v1858 = vpack.c.b16 %v1846, %v1845
        %v1859 = vpack.c.b16 %v1848, %v1847
        %v1860 = vpack.c.b16 %v1850, %v1849
        %v1861 = vpack.c.b16 %v1852, %v1851
        %v1862 = vpack.c.b16 %v1854, %v1853
        %1871 = vmatpush.bf16.msra.mxu0 %v1862
        %1872 = vmatpush.bf16.msra.mxu0 %v1861
        %1873 = vmatpush.bf16.msra.mxu0 %v1860
        %1874 = vmatpush.bf16.msra.mxu0 %v1859
        %1875 = vmatpush.bf16.msra.mxu0 %v1858
        %1876 = vmatpush.bf16.msra.mxu0 %v1857
        %1877 = vmatpush.bf16.msra.mxu0 %v1856
        %1878 = vmatpush.bf16.msra.mxu0 %v1855
        %1879 = vmatmul.bf16.gmra.mxu0 %v1806
        %v1880 = vpop.f32.mrf.mxu0
        %v1881 = vadd.f32 0.0, %v1880
        %v1882 = vpop.f32.mrf.mxu0
        %1883 = vdwg.mxu0
        %v1884 = vadd.f32 %v1805, %v1881
        %1885 = vst.msk [vmem:[%s751] sm:$0xff] %vm1779, %v1884
        %s1886 = sand.u32 %s410, 1
        %s1887 = scalar_lea.sflag [#allocation5], %s1886
        %s1888 = sand.u32 %s410, 1
        %s1889 = smul.addr %s1888, 8
        %s1890 = scalar_lea.vmem [#allocation16], %s1889
        // Predicated region
        $region158: #{tpu_custom_call.1} parent=120 // pred_check
          %p1891 = pneg %p420
        $region159: #{tpu_custom_call.1} parent=120 // pred_check_branch
          %1893 = sbr.rel (%p1891) target = $region161
        $region160: #{tpu_custom_call.1} parent=120 // pred_region
          %1895 = vsyncadd %s1887, 0
          %s1896 = smul.addr %s38, 8
          %s1897 = scalar_lea.hbm %s16, %s1896
          %s1899 = sshll.u32 %s1890, 4
          %s1900 = int_to_ptr.vmem [resolvable:$true] %s1899
          %s1901 = sshll.u32 %s1897, 4
          %s1902 = int_to_ptr.hbm [resolvable:$true] %s1901
          %1904 = dma.vmem_to_hbm [thread:$0]  %s1900, 128, %s1902, %s1887
        $region161: #{tpu_custom_call.1} parent=120 // pred_fallthru
          _
      $region121: #{tpu_custom_call.1} parent=5 // pred_fallthru
        _
      %p1905 = scmp.le.s32.totalorder 2, %s29
      // Predicated region
      $region162: #{tpu_custom_call.1} parent=5 // pred_check
        %p1906 = pneg %p1905
      $region163: #{tpu_custom_call.1} parent=5 // pred_check_branch
        %1908 = sbr.rel (%p1906) target = $region165
      $region164: #{tpu_custom_call.1} parent=5 // pred_region
        %s1909 = ssub.s32 %s29, 2
        // Predicated region
        $region166: #{tpu_custom_call.1} parent=164 // pred_check
          %p1910 = pneg %p426
        $region167: #{tpu_custom_call.1} parent=164 // pred_check_branch
          %1912 = sbr.rel (%p1910) target = $region169
        $region168: #{tpu_custom_call.1} parent=164 // pred_region
          %s1913 = sand.u32 %s411, 1
          %s1914 = scalar_lea.sflag [#allocation5], %s1913
          %s1915 = sand.u32 %s411, 1
          %s1916 = smul.addr %s1915, 8
          %s1917 = scalar_lea.vmem [#allocation16], %s1916
          %1919 = dma.done %s1914, 128
        $region169: #{tpu_custom_call.1} parent=164 // pred_fallthru
          _
      $region165: #{tpu_custom_call.1} parent=5 // pred_fallthru
        _
    $region6: #{tpu_custom_call.1} parent=1 // loop_footer
      %s33 = sadd.s32 1, %s29
    $region7: #{tpu_custom_call.1} parent=1 // loop_footer_branch
      %28 = sbr.rel target = $region3
    $region8: #{tpu_custom_call.1} parent=1 // loop_exit
      _
    %1920 = vsyncpa [#allocation4], 1
    %s1921 = scalar_lea.sflag [#allocation4], 1
    %1922 = vsyncpa %s1921, 1
    %1923 = vsyncpa [#allocation7], 1
    %1924 = vsyncpa [#allocation10], 1
    %1925 = vsyncpa [#allocation13], 1
    %1926 = vsyncpa [#allocation5], 1
    %s1927 = scalar_lea.sflag [#allocation5], 1
    %1928 = vsyncpa %s1927, 1

</llo_original>
